<compile_context>
chip_gen: v7x
topology: tpu7x:2x2x1
jax: 0.10.0
libtpu: 0.0.40
codegen_flags: <defaults>
</compile_context>

<pallas_src>
import jax
import jax.numpy as jnp
from jax.experimental import pallas as pl
from jax.experimental.pallas import tpu as pltpu


def _last_octave_cbr_kernel(xh_ref, xl_ref, wh_ref, wl_ref,
                            scale_ref, shift_ref, out_ref):
    """Fused octave conv + BN + ReLU for one (batch, row-strip) grid point.

    xh_ref : (H+2,  W+2,  Ch)   padded high-frequency image (bf16), resident
    xl_ref : (Hl+2, Wl+2, Cl)   padded low-frequency image  (bf16), resident
    wh_ref : (9*Ch, Cp)         h2h 3x3 weights, (ky,kx,Cin)-major, Cout padded
    wl_ref : (9*Cl, Cp)         l2h 3x3 weights
    scale_ref, shift_ref : (1, Cp)   fused BatchNorm affine (f32)
    out_ref: (TH, W, Cp)        one output row strip (f32, lane-dense)
    """
    TH, W, Cp = out_ref.shape
    THl, Wl = TH // 2, W // 2
    Ch = xh_ref.shape[-1]
    Cl = xl_ref.shape[-1]

    s = pl.program_id(1)
    r_h = pl.multiple_of(s * TH, TH)      # first padded row of this strip (high)
    r_l = pl.multiple_of(s * THl, THl)    # first padded row of this strip (low)

    xh = xh_ref[pl.ds(r_h, TH + 2), :, :]     # (TH+2,  W+2,  Ch)
    xl = xl_ref[pl.ds(r_l, THl + 2), :, :]    # (THl+2, Wl+2, Cl)

    # im2col: concat the 9 shifted taps along K, one MXU matmul per branch.
    patch_h = jnp.concatenate(
        [xh[dy:dy + TH, dx:dx + W, :].reshape(TH * W, Ch)
         for dy in range(3) for dx in range(3)], axis=-1)           # (TH*W, 9*Ch)
    patch_l = jnp.concatenate(
        [xl[dy:dy + THl, dx:dx + Wl, :].reshape(THl * Wl, Cl)
         for dy in range(3) for dx in range(3)], axis=-1)           # (THl*Wl, 9*Cl)

    h2h = jnp.dot(patch_h, wh_ref[...],
                  preferred_element_type=jnp.float32)               # (TH*W, Cp)
    l2h = jnp.dot(patch_l, wl_ref[...],
                  preferred_element_type=jnp.float32)               # (THl*Wl, Cp)

    # nearest-neighbor 2x upsample of the (4x smaller) low branch, then add
    # into the high branch in its natural (TH, W, Cp) layout.
    l2h3 = l2h.reshape(THl, Wl, Cp)
    l2h_up = jnp.broadcast_to(l2h3[:, None, :, None, :],
                              (THl, 2, Wl, 2, Cp)).reshape(TH, W, Cp)
    y = h2h.reshape(TH, W, Cp) + l2h_up

    # fused BatchNorm (inference form) + ReLU, f32 epilogue, lane-dense store.
    y = y * scale_ref[...].reshape(1, 1, Cp) + shift_ref[...].reshape(1, 1, Cp)
    out_ref[...] = jnp.maximum(y, 0.0).astype(out_ref.dtype)


def _pick_tile_h(H, W, Cp, budget_bytes=2 << 20):
    """Largest even divisor of H (< H) whose f32 output strip fits the budget."""
    for cand in sorted((d for d in range(2, H, 2) if H % d == 0), reverse=True):
        if cand * W * Cp * 4 <= budget_bytes:
            return cand
    return H


def last_octave_cbr(x_h_nchw, x_l_nchw, w_h_hwio, w_l_hwio,
                    gamma, beta, run_mean, run_var, eps=1e-5):
    """Wrapper: NCHW in / NCHW out, kernel works in NHWC with padded lanes."""
    N, Ch, H, W = x_h_nchw.shape
    _, Cl, Hl, Wl = x_l_nchw.shape
    Cout = w_h_hwio.shape[-1]
    assert (Hl, Wl) == (H // 2, W // 2) and H % 2 == 0 and W % 2 == 0

    Cp = max(128, ((Cout + 127) // 128) * 128)     # lane-dense output channels
    tile_h = _pick_tile_h(H, W, Cp)
    n_strips = H // tile_h

    # glue: layout change + bf16 cast + explicit "same" halo padding.
    # TODO(synk): the pad/transpose are HBM round-trips outside the kernel;
    #             accept NHWC inputs upstream / in-kernel halo for production.
    xh = jnp.transpose(x_h_nchw, (0, 2, 3, 1)).astype(jnp.bfloat16)
    xl = jnp.transpose(x_l_nchw, (0, 2, 3, 1)).astype(jnp.bfloat16)
    xh_p = jnp.pad(xh, ((0, 0), (1, 1), (1, 1), (0, 0)))
    xl_p = jnp.pad(xl, ((0, 0), (1, 1), (1, 1), (0, 0)))

    # HWIO 3x3 weights -> (9*Cin, Cp), zero-padded along Cout to 128 lanes.
    wh = jnp.zeros((9 * Ch, Cp), jnp.bfloat16).at[:, :Cout].set(
        w_h_hwio.reshape(9 * Ch, Cout).astype(jnp.bfloat16))
    wl = jnp.zeros((9 * Cl, Cp), jnp.bfloat16).at[:, :Cout].set(
        w_l_hwio.reshape(9 * Cl, Cout).astype(jnp.bfloat16))

    # fold BN running stats into a single scale/shift (f32), lane-padded.
    g32 = gamma.astype(jnp.float32)
    inv_std = 1.0 / jnp.sqrt(run_var.astype(jnp.float32) + eps)
    scale = jnp.zeros((1, Cp), jnp.float32).at[0, :Cout].set(g32 * inv_std)
    shift = jnp.zeros((1, Cp), jnp.float32).at[0, :Cout].set(
        beta.astype(jnp.float32) - run_mean.astype(jnp.float32) * g32 * inv_std)

    out_padded = pl.pallas_call(
        _last_octave_cbr_kernel,
        out_shape=jax.ShapeDtypeStruct((N, H, W, Cp), jnp.float32),
        grid=(N, n_strips),
        in_specs=[
            pl.BlockSpec((None, H + 2, W + 2, Ch), lambda n, s: (n, 0, 0, 0)),
            pl.BlockSpec((None, Hl + 2, Wl + 2, Cl), lambda n, s: (n, 0, 0, 0)),
            pl.BlockSpec((9 * Ch, Cp), lambda n, s: (0, 0)),
            pl.BlockSpec((9 * Cl, Cp), lambda n, s: (0, 0)),
            pl.BlockSpec((1, Cp), lambda n, s: (0, 0)),
            pl.BlockSpec((1, Cp), lambda n, s: (0, 0)),
        ],
        out_specs=pl.BlockSpec((None, tile_h, W, Cp), lambda n, s: (n, s, 0, 0)),
        compiler_params=pltpu.CompilerParams(
            dimension_semantics=("parallel", "parallel"),
            vmem_limit_bytes=48 * 1024 * 1024),
    )(xh_p, xl_p, wh, wl, scale, shift)

    return jnp.transpose(out_padded[..., :Cout], (0, 3, 1, 2))  # back to NCHW


def _reference(x_h_nchw, x_l_nchw, w_h_hwio, w_l_hwio,
               gamma, beta, run_mean, run_var, eps=1e-5):
    """Pure-JAX reference (mirrors the kernel's bf16 input rounding)."""
    f32 = jnp.float32
    xh = jnp.transpose(x_h_nchw, (0, 2, 3, 1)).astype(jnp.bfloat16).astype(f32)
    xl = jnp.transpose(x_l_nchw, (0, 2, 3, 1)).astype(jnp.bfloat16).astype(f32)
    wh = w_h_hwio.astype(jnp.bfloat16).astype(f32)
    wl = w_l_hwio.astype(jnp.bfloat16).astype(f32)
    dn = ('NHWC', 'HWIO', 'NHWC')
    h2h = jax.lax.conv_general_dilated(xh, wh, (1, 1), ((1, 1), (1, 1)),
                                       dimension_numbers=dn)
    l2h = jax.lax.conv_general_dilated(xl, wl, (1, 1), ((1, 1), (1, 1)),
                                       dimension_numbers=dn)
    l2h_up = jnp.repeat(jnp.repeat(l2h, 2, axis=1), 2, axis=2)
    y = h2h + l2h_up
    y = (y - run_mean) / jnp.sqrt(run_var + eps) * gamma + beta
    y = jnp.maximum(y, 0.0)
    return jnp.transpose(y, (0, 3, 1, 2))


if __name__ == "__main__":
    # Module config: in_channels=4, out_channels=8, alpha=0.5, stride=1
    #   -> C_l = int(0.5*4) = 2, C_h = 4 - 2 = 2
    N, Cin, Cout, H, W = 2, 4, 8, 16, 16
    Cl = int(0.5 * Cin)
    Ch = Cin - Cl
    Hl, Wl = H // 2, W // 2

    key = jax.random.PRNGKey(0)
    k_xh, k_xl, k_wh, k_wl, k_g, k_b, k_m, k_v = jax.random.split(key, 8)

    x_h = jax.random.normal(k_xh, (N, Ch, H, W), jnp.float32)
    x_l = jax.random.normal(k_xl, (N, Cl, Hl, Wl), jnp.float32)

    # deterministic synthetic parameters (HWIO conv weights, BN affine + stats)
    w_h = 0.1 * jax.random.normal(k_wh, (3, 3, Ch, Cout), jnp.float32)
    w_l = 0.1 * jax.random.normal(k_wl, (3, 3, Cl, Cout), jnp.float32)
    gamma = 1.0 + 0.1 * jax.random.normal(k_g, (Cout,), jnp.float32)
    beta = 0.1 * jax.random.normal(k_b, (Cout,), jnp.float32)
    run_mean = 0.1 * jax.random.normal(k_m, (Cout,), jnp.float32)
    run_var = 0.5 + jnp.abs(jax.random.normal(k_v, (Cout,), jnp.float32))

    out = last_octave_cbr(x_h, x_l, w_h, w_l, gamma, beta, run_mean, run_var)
    out = jax.block_until_ready(out)

    ref = _reference(x_h, x_l, w_h, w_l, gamma, beta, run_mean, run_var)
    assert out.shape == (N, Cout, H, W), out.shape
    assert jnp.allclose(out, ref, atol=1e-3, rtol=1e-3), \
        float(jnp.max(jnp.abs(out - ref)))

    print("KERNEL_OK")
</pallas_src>

<mosaic_0001>
module attributes {stable_mosaic.version = 11 : i64} {
  func.func @_last_octave_cbr_kernel(%arg0: i32, %arg1: i32, %arg2: memref<1x18x18x2xbf16, #tpu.memory_space<vmem>>, %arg3: memref<1x10x10x2xbf16, #tpu.memory_space<vmem>>, %arg4: memref<18x128xbf16, #tpu.memory_space<vmem>>, %arg5: memref<18x128xbf16, #tpu.memory_space<vmem>>, %arg6: memref<1x128xf32, #tpu.memory_space<vmem>>, %arg7: memref<1x128xf32, #tpu.memory_space<vmem>>, %arg8: memref<1x8x16x128xf32, #tpu.memory_space<vmem>>) attributes {dimension_semantics = [#tpu.dimension_semantics<parallel>, #tpu.dimension_semantics<parallel>], iteration_bounds = array<i64: 2, 2>, scalar_prefetch = 0 : i64, scratch_operands = 0 : i64, tpu.core_type = #tpu.core_type<tc>, window_params = [{transform_indices = @transform_0, window_bounds = array<i64: 1, 18, 18, 2>}, {transform_indices = @transform_1, window_bounds = array<i64: 1, 10, 10, 2>}, {pipeline_mode = #tpu.pipeline_mode<synchronous>, transform_indices = @transform_2, window_bounds = array<i64: 18, 128>}, {pipeline_mode = #tpu.pipeline_mode<synchronous>, transform_indices = @transform_3, window_bounds = array<i64: 18, 128>}, {pipeline_mode = #tpu.pipeline_mode<synchronous>, transform_indices = @transform_4, window_bounds = array<i64: 1, 128>}, {pipeline_mode = #tpu.pipeline_mode<synchronous>, transform_indices = @transform_5, window_bounds = array<i64: 1, 128>}, {transform_indices = @transform_6, window_bounds = array<i64: 1, 8, 16, 128>}]} {
    %c8_i32 = arith.constant 8 : i32
    %0 = arith.muli %arg1, %c8_i32 : i32
    %1 = tpu.assume_multiple %0, 8 : i32
    %c4_i32 = arith.constant 4 : i32
    %2 = arith.muli %arg1, %c4_i32 : i32
    %3 = tpu.assume_multiple %2, 4 : i32
    %c0 = arith.constant 0 : index
    %4 = arith.index_cast %1 : i32 to index
    %c0_0 = arith.constant 0 : index
    %c0_1 = arith.constant 0 : index
    %5 = vector.load %arg2[%c0, %4, %c0_0, %c0_1] : memref<1x18x18x2xbf16, #tpu.memory_space<vmem>>, vector<1x10x18x2xbf16>
    %6 = vector.shape_cast %5 : vector<1x10x18x2xbf16> to vector<10x18x2xbf16>
    %c0_2 = arith.constant 0 : index
    %7 = arith.index_cast %3 : i32 to index
    %c0_3 = arith.constant 0 : index
    %c0_4 = arith.constant 0 : index
    %8 = vector.load %arg3[%c0_2, %7, %c0_3, %c0_4] : memref<1x10x10x2xbf16, #tpu.memory_space<vmem>>, vector<1x6x10x2xbf16>
    %9 = vector.shape_cast %8 : vector<1x6x10x2xbf16> to vector<6x10x2xbf16>
    %10 = vector.extract_strided_slice %6 {offsets = [0, 0, 0], sizes = [8, 16, 2], strides = [1, 1, 1]} : vector<10x18x2xbf16> to vector<8x16x2xbf16>
    %11 = vector.shape_cast %10 : vector<8x16x2xbf16> to vector<128x2xbf16>
    %12 = vector.extract_strided_slice %6 {offsets = [0, 1, 0], sizes = [8, 16, 2], strides = [1, 1, 1]} : vector<10x18x2xbf16> to vector<8x16x2xbf16>
    %13 = vector.shape_cast %12 : vector<8x16x2xbf16> to vector<128x2xbf16>
    %14 = vector.extract_strided_slice %6 {offsets = [0, 2, 0], sizes = [8, 16, 2], strides = [1, 1, 1]} : vector<10x18x2xbf16> to vector<8x16x2xbf16>
    %15 = vector.shape_cast %14 : vector<8x16x2xbf16> to vector<128x2xbf16>
    %16 = vector.extract_strided_slice %6 {offsets = [1, 0, 0], sizes = [8, 16, 2], strides = [1, 1, 1]} : vector<10x18x2xbf16> to vector<8x16x2xbf16>
    %17 = vector.shape_cast %16 : vector<8x16x2xbf16> to vector<128x2xbf16>
    %18 = vector.extract_strided_slice %6 {offsets = [1, 1, 0], sizes = [8, 16, 2], strides = [1, 1, 1]} : vector<10x18x2xbf16> to vector<8x16x2xbf16>
    %19 = vector.shape_cast %18 : vector<8x16x2xbf16> to vector<128x2xbf16>
    %20 = vector.extract_strided_slice %6 {offsets = [1, 2, 0], sizes = [8, 16, 2], strides = [1, 1, 1]} : vector<10x18x2xbf16> to vector<8x16x2xbf16>
    %21 = vector.shape_cast %20 : vector<8x16x2xbf16> to vector<128x2xbf16>
    %22 = vector.extract_strided_slice %6 {offsets = [2, 0, 0], sizes = [8, 16, 2], strides = [1, 1, 1]} : vector<10x18x2xbf16> to vector<8x16x2xbf16>
    %23 = vector.shape_cast %22 : vector<8x16x2xbf16> to vector<128x2xbf16>
    %24 = vector.extract_strided_slice %6 {offsets = [2, 1, 0], sizes = [8, 16, 2], strides = [1, 1, 1]} : vector<10x18x2xbf16> to vector<8x16x2xbf16>
    %25 = vector.shape_cast %24 : vector<8x16x2xbf16> to vector<128x2xbf16>
    %26 = vector.extract_strided_slice %6 {offsets = [2, 2, 0], sizes = [8, 16, 2], strides = [1, 1, 1]} : vector<10x18x2xbf16> to vector<8x16x2xbf16>
    %27 = vector.shape_cast %26 : vector<8x16x2xbf16> to vector<128x2xbf16>
    %28 = tpu.concatenate %11, %13, %15, %17, %19, %21, %23, %25, %27 in 1 : vector<128x2xbf16>, vector<128x2xbf16>, vector<128x2xbf16>, vector<128x2xbf16>, vector<128x2xbf16>, vector<128x2xbf16>, vector<128x2xbf16>, vector<128x2xbf16>, vector<128x2xbf16> -> vector<128x18xbf16>
    %29 = vector.extract_strided_slice %9 {offsets = [0, 0, 0], sizes = [4, 8, 2], strides = [1, 1, 1]} : vector<6x10x2xbf16> to vector<4x8x2xbf16>
    %30 = vector.shape_cast %29 : vector<4x8x2xbf16> to vector<32x2xbf16>
    %31 = vector.extract_strided_slice %9 {offsets = [0, 1, 0], sizes = [4, 8, 2], strides = [1, 1, 1]} : vector<6x10x2xbf16> to vector<4x8x2xbf16>
    %32 = vector.shape_cast %31 : vector<4x8x2xbf16> to vector<32x2xbf16>
    %33 = vector.extract_strided_slice %9 {offsets = [0, 2, 0], sizes = [4, 8, 2], strides = [1, 1, 1]} : vector<6x10x2xbf16> to vector<4x8x2xbf16>
    %34 = vector.shape_cast %33 : vector<4x8x2xbf16> to vector<32x2xbf16>
    %35 = vector.extract_strided_slice %9 {offsets = [1, 0, 0], sizes = [4, 8, 2], strides = [1, 1, 1]} : vector<6x10x2xbf16> to vector<4x8x2xbf16>
    %36 = vector.shape_cast %35 : vector<4x8x2xbf16> to vector<32x2xbf16>
    %37 = vector.extract_strided_slice %9 {offsets = [1, 1, 0], sizes = [4, 8, 2], strides = [1, 1, 1]} : vector<6x10x2xbf16> to vector<4x8x2xbf16>
    %38 = vector.shape_cast %37 : vector<4x8x2xbf16> to vector<32x2xbf16>
    %39 = vector.extract_strided_slice %9 {offsets = [1, 2, 0], sizes = [4, 8, 2], strides = [1, 1, 1]} : vector<6x10x2xbf16> to vector<4x8x2xbf16>
    %40 = vector.shape_cast %39 : vector<4x8x2xbf16> to vector<32x2xbf16>
    %41 = vector.extract_strided_slice %9 {offsets = [2, 0, 0], sizes = [4, 8, 2], strides = [1, 1, 1]} : vector<6x10x2xbf16> to vector<4x8x2xbf16>
    %42 = vector.shape_cast %41 : vector<4x8x2xbf16> to vector<32x2xbf16>
    %43 = vector.extract_strided_slice %9 {offsets = [2, 1, 0], sizes = [4, 8, 2], strides = [1, 1, 1]} : vector<6x10x2xbf16> to vector<4x8x2xbf16>
    %44 = vector.shape_cast %43 : vector<4x8x2xbf16> to vector<32x2xbf16>
    %45 = vector.extract_strided_slice %9 {offsets = [2, 2, 0], sizes = [4, 8, 2], strides = [1, 1, 1]} : vector<6x10x2xbf16> to vector<4x8x2xbf16>
    %46 = vector.shape_cast %45 : vector<4x8x2xbf16> to vector<32x2xbf16>
    %47 = tpu.concatenate %30, %32, %34, %36, %38, %40, %42, %44, %46 in 1 : vector<32x2xbf16>, vector<32x2xbf16>, vector<32x2xbf16>, vector<32x2xbf16>, vector<32x2xbf16>, vector<32x2xbf16>, vector<32x2xbf16>, vector<32x2xbf16>, vector<32x2xbf16> -> vector<32x18xbf16>
    %c0_5 = arith.constant 0 : index
    %c0_6 = arith.constant 0 : index
    %48 = vector.load %arg4[%c0_5, %c0_6] : memref<18x128xbf16, #tpu.memory_space<vmem>>, vector<18x128xbf16>
    %cst = arith.constant dense<0.000000e+00> : vector<128x128xf32>
    %49 = tpu.matmul %28, %48, %cst {dimension_numbers = #tpu.dot_dimension_numbers<[1], [0], [0], [1], [0, 0, 1, 1], [], []>} : vector<128x18xbf16>, vector<18x128xbf16>, vector<128x128xf32> -> vector<128x128xf32>
    %c0_7 = arith.constant 0 : index
    %c0_8 = arith.constant 0 : index
    %50 = vector.load %arg5[%c0_7, %c0_8] : memref<18x128xbf16, #tpu.memory_space<vmem>>, vector<18x128xbf16>
    %cst_9 = arith.constant dense<0.000000e+00> : vector<32x128xf32>
    %51 = tpu.matmul %47, %50, %cst_9 {dimension_numbers = #tpu.dot_dimension_numbers<[1], [0], [0], [1], [0, 0, 1, 1], [], []>} : vector<32x18xbf16>, vector<18x128xbf16>, vector<32x128xf32> -> vector<32x128xf32>
    %52 = vector.shape_cast %51 : vector<32x128xf32> to vector<4x8x128xf32>
    %53 = vector.shape_cast %52 : vector<4x8x128xf32> to vector<4x1x8x1x128xf32>
    %54 = vector.shape_cast %53 : vector<4x1x8x1x128xf32> to vector<4x1x8x1x128xf32>
    %55 = vector.broadcast %54 : vector<4x1x8x1x128xf32> to vector<4x2x8x2x128xf32>
    %56 = vector.shape_cast %55 : vector<4x2x8x2x128xf32> to vector<8x16x128xf32>
    %57 = vector.shape_cast %49 : vector<128x128xf32> to vector<8x16x128xf32>
    %58 = arith.addf %57, %56 : vector<8x16x128xf32>
    %c0_10 = arith.constant 0 : index
    %c0_11 = arith.constant 0 : index
    %59 = vector.load %arg6[%c0_10, %c0_11] : memref<1x128xf32, #tpu.memory_space<vmem>>, vector<1x128xf32>
    %60 = vector.shape_cast %59 : vector<1x128xf32> to vector<1x1x128xf32>
    %61 = vector.broadcast %60 : vector<1x1x128xf32> to vector<8x16x128xf32>
    %62 = arith.mulf %58, %61 : vector<8x16x128xf32>
    %c0_12 = arith.constant 0 : index
    %c0_13 = arith.constant 0 : index
    %63 = vector.load %arg7[%c0_12, %c0_13] : memref<1x128xf32, #tpu.memory_space<vmem>>, vector<1x128xf32>
    %64 = vector.shape_cast %63 : vector<1x128xf32> to vector<1x1x128xf32>
    %65 = vector.broadcast %64 : vector<1x1x128xf32> to vector<8x16x128xf32>
    %66 = arith.addf %62, %65 : vector<8x16x128xf32>
    %cst_14 = arith.constant 0.000000e+00 : f32
    %67 = vector.broadcast %cst_14 : f32 to vector<8x16x128xf32>
    %68 = arith.maximumf %66, %67 : vector<8x16x128xf32>
    %c0_15 = arith.constant 0 : index
    %c0_16 = arith.constant 0 : index
    %c0_17 = arith.constant 0 : index
    %c0_18 = arith.constant 0 : index
    %69 = vector.load %arg8[%c0_15, %c0_16, %c0_17, %c0_18] : memref<1x8x16x128xf32, #tpu.memory_space<vmem>>, vector<1x8x16x128xf32>
    %70 = vector.shape_cast %69 : vector<1x8x16x128xf32> to vector<8x16x128xf32>
    %71 = vector.shape_cast %68 : vector<8x16x128xf32> to vector<1x8x16x128xf32>
    tpu.vector_store %arg8[%c0_15, %c0_16, %c0_17, %c0_18], %71 {strides = array<i32>} : memref<1x8x16x128xf32, #tpu.memory_space<vmem>>, vector<1x8x16x128xf32>,
    return
  }
  func.func @transform_0(%arg0: i32, %arg1: i32) -> (i32, i32, i32, i32) {
    %c0_i32 = arith.constant 0 : i32
    %c0_i32_0 = arith.constant 0 : i32
    %c0_i32_1 = arith.constant 0 : i32
    %c0_i32_2 = arith.constant 0 : i32
    return %arg0, %c0_i32, %c0_i32_0, %c0_i32_1 : i32, i32, i32, i32
  }
  func.func @transform_1(%arg0: i32, %arg1: i32) -> (i32, i32, i32, i32) {
    %c0_i32 = arith.constant 0 : i32
    %c0_i32_0 = arith.constant 0 : i32
    %c0_i32_1 = arith.constant 0 : i32
    %c0_i32_2 = arith.constant 0 : i32
    return %arg0, %c0_i32, %c0_i32_0, %c0_i32_1 : i32, i32, i32, i32
  }
  func.func @transform_2(%arg0: i32, %arg1: i32) -> (i32, i32) {
    %c0_i32 = arith.constant 0 : i32
    %c0_i32_0 = arith.constant 0 : i32
    %c0_i32_1 = arith.constant 0 : i32
    return %c0_i32, %c0_i32_0 : i32, i32
  }
  func.func @transform_3(%arg0: i32, %arg1: i32) -> (i32, i32) {
    %c0_i32 = arith.constant 0 : i32
    %c0_i32_0 = arith.constant 0 : i32
    %c0_i32_1 = arith.constant 0 : i32
    return %c0_i32, %c0_i32_0 : i32, i32
  }
  func.func @transform_4(%arg0: i32, %arg1: i32) -> (i32, i32) {
    %c0_i32 = arith.constant 0 : i32
    %c0_i32_0 = arith.constant 0 : i32
    %c0_i32_1 = arith.constant 0 : i32
    return %c0_i32, %c0_i32_0 : i32, i32
  }
  func.func @transform_5(%arg0: i32, %arg1: i32) -> (i32, i32) {
    %c0_i32 = arith.constant 0 : i32
    %c0_i32_0 = arith.constant 0 : i32
    %c0_i32_1 = arith.constant 0 : i32
    return %c0_i32, %c0_i32_0 : i32, i32
  }
  func.func @transform_6(%arg0: i32, %arg1: i32) -> (i32, i32, i32, i32) {
    %c0_i32 = arith.constant 0 : i32
    %c0_i32_0 = arith.constant 0 : i32
    %c0_i32_1 = arith.constant 0 : i32
    return %arg0, %arg1, %c0_i32, %c0_i32_0 : i32, i32, i32, i32
  }
}

</mosaic_0001>

<llo_original>
// kernel: tpu_custom_call.1
$region0: #{tpu_custom_call.1}
  #allocation0 [shape = 'u32[]', space=smem, size = 0x4, offset = 0x4, fixed_abs, tag = 'smem constant byte address 0x4 - core index']
  #allocation1 [shape = 'u32[144,128]{1,0:T(1,128)}', space=vmem, size = 0x12000, scoped, tag = 'internal scratch']
  %s0 = inlined_call_operand.vmem [shape: bf16[2,18,18,2], index: 0, kind: input, shape index: {}]
  %s1 = inlined_call_operand.vmem [shape: bf16[2,10,10,2], index: 1, kind: input, shape index: {}]
  %s2 = inlined_call_operand.vmem [shape: bf16[18,128], index: 2, kind: input, shape index: {}]
  %s3 = inlined_call_operand.vmem [shape: bf16[18,128], index: 3, kind: input, shape index: {}]
  %s4 = inlined_call_operand.vmem [shape: f32[1,128], index: 4, kind: input, shape index: {}]
  %s5 = inlined_call_operand.vmem [shape: f32[1,128], index: 5, kind: input, shape index: {}]
  %s6 = inlined_call_operand.hbm [shape: f32[2,16,16,128], index: 6, kind: output, shape index: {}]
  %s7 = sld [smem:[#allocation0]]
  $region57: #{tpu_custom_call.1} parent=0
    _
  %s9 = ssub.s32 1, %s7
  %s10 = scalar_select 0, %s9, %s7
  $region1: #{tpu_custom_call.1} parent=0
    #allocation2 [shape = 'u8[131072]{0}', space=vmem, size = 0x20000, scoped, tag = 'output window, operand 0']
    #allocation3 [shape = 's32[2]{0}', space=sflag, size = 0x8, scoped, tag = 'scoped memory for tpu_custom_call.1']
    %11 = vsyncpa [#allocation3], 0
    %s12 = scalar_lea.sflag [#allocation3], 1
    %13 = vsyncpa %s12, 0
    loop: start=0, step=1, limit=6
    $region2: #{tpu_custom_call.1} parent=1 // loop_pre_header
      _
    $region3: #{tpu_custom_call.1} parent=1 // loop_header
      %s15 = sphi 0, %s19
      %p16 = scmp.ge.s32.totalorder %s15, 6
      %s22 = sphi 0, %s34
      %s23 = sphi 0, %s30
      %s24 = sphi 0, %s22
      %s25 = sphi 0, %s23
      %s26 = sphi 0, %s24
      %s27 = sphi 0, %s25
      %s37 = sphi 0, %s39
      %s40 = sphi 0, %s37
      %s41 = sphi 0, %s40
      %s57 = sphi 0, %s41
      %s63 = sphi 0, %s65
      %s66 = sphi 0, %s63
      %s67 = sphi 0, %s66
      %s83 = sphi 0, %s67
      %s87 = sphi 0, %s87
      %s89 = sphi 0, %s87
      %s90 = sphi 0, %s89
      %s104 = sphi 0, %s90
      %s108 = sphi 0, %s108
      %s110 = sphi 0, %s108
      %s111 = sphi 0, %s110
      %s125 = sphi 0, %s111
      %s129 = sphi 0, %s129
      %s131 = sphi 0, %s129
      %s132 = sphi 0, %s131
      %s146 = sphi 0, %s132
      %s150 = sphi 0, %s150
      %s152 = sphi 0, %s150
      %s153 = sphi 0, %s152
      %s167 = sphi 0, %s153
      %s175 = sphi 0, %s177
      %s178 = sphi 0, %s175
      %s179 = sphi 0, %s178
      %s195 = sphi 0, %s179
    $region4: #{tpu_custom_call.1} parent=1 // loop_header_branch
      %18 = sbr.rel (%p16) target = $region8
    $region5: #{tpu_custom_call.1} parent=1 // loop_body
      %s20 = ssub.s32 %s15, 1
      %s21 = ssub.s32 %s15, 2
      %s28 = sadd.s32 1, %s23
      %p29 = scmp.ge.s32.totalorder %s28, 2
      %s30 = scalar_select %p29, 0, %s28
      %s31 = sadd.s32 1, %s22
      %s32 = scalar_select %p29, %s31, %s22
      %p33 = scmp.ge.s32.totalorder %s32, 2
      %s34 = scalar_select %p33, 0, %s32
      %s35 = ssub.s32 %s22, %s34
      %p36 = scmp.eq.s32.totalorder %s35, 0
      %s38 = sadd.s32 %s37, 1
      %s39 = scalar_select %p36, %s37, %s38
      %p42 = pneg %p36
      %p43 = scmp.eq.s32.totalorder %s15, 3
      %p44 = por %p42, %p43
      %p45 = scmp.ne.s32.totalorder %s37, %s40
      %p46 = scmp.eq.s32.totalorder %s15, 0
      %p47 = por %p45, %p46
      %p48 = scmp.ne.s32.totalorder %s37, %s40
      %p49 = scmp.eq.s32.totalorder %s20, 3
      %p50 = por %p48, %p49
      %p51 = scmp.ne.s32.totalorder %s40, %s41
      %p52 = scmp.eq.s32.totalorder %s20, 0
      %p53 = por %p51, %p52
      %p54 = scmp.ne.s32.totalorder %s40, %s41
      %p55 = scmp.eq.s32.totalorder %s21, 3
      %p56 = por %p54, %p55
      %p58 = scmp.ne.s32.totalorder %s41, %s57
      %p59 = scmp.eq.s32.totalorder %s21, 0
      %p60 = por %p58, %p59
      %s61 = ssub.s32 %s22, %s34
      %p62 = scmp.eq.s32.totalorder %s61, 0
      %s64 = sadd.s32 %s63, 1
      %s65 = scalar_select %p62, %s63, %s64
      %p68 = pneg %p62
      %p69 = scmp.eq.s32.totalorder %s15, 3
      %p70 = por %p68, %p69
      %p71 = scmp.ne.s32.totalorder %s63, %s66
      %p72 = scmp.eq.s32.totalorder %s15, 0
      %p73 = por %p71, %p72
      %p74 = scmp.ne.s32.totalorder %s63, %s66
      %p75 = scmp.eq.s32.totalorder %s20, 3
      %p76 = por %p74, %p75
      %p77 = scmp.ne.s32.totalorder %s66, %s67
      %p78 = scmp.eq.s32.totalorder %s20, 0
      %p79 = por %p77, %p78
      %p80 = scmp.ne.s32.totalorder %s66, %s67
      %p81 = scmp.eq.s32.totalorder %s21, 3
      %p82 = por %p80, %p81
      %p84 = scmp.ne.s32.totalorder %s67, %s83
      %p85 = scmp.eq.s32.totalorder %s21, 0
      %p86 = por %p84, %p85
      %s88 = sadd.s32 %s87, 1
      %p91 = scmp.eq.s32.totalorder %s15, 3
      %p92 = scmp.ne.s32.totalorder %s87, %s89
      %p93 = scmp.eq.s32.totalorder %s15, 0
      %p94 = por %p92, %p93
      %p95 = scmp.ne.s32.totalorder %s87, %s89
      %p96 = scmp.eq.s32.totalorder %s20, 3
      %p97 = por %p95, %p96
      %p98 = scmp.ne.s32.totalorder %s89, %s90
      %p99 = scmp.eq.s32.totalorder %s20, 0
      %p100 = por %p98, %p99
      %p101 = scmp.ne.s32.totalorder %s89, %s90
      %p102 = scmp.eq.s32.totalorder %s21, 3
      %p103 = por %p101, %p102
      %p105 = scmp.ne.s32.totalorder %s90, %s104
      %p106 = scmp.eq.s32.totalorder %s21, 0
      %p107 = por %p105, %p106
      %s109 = sadd.s32 %s108, 1
      %p112 = scmp.eq.s32.totalorder %s15, 3
      %p113 = scmp.ne.s32.totalorder %s108, %s110
      %p114 = scmp.eq.s32.totalorder %s15, 0
      %p115 = por %p113, %p114
      %p116 = scmp.ne.s32.totalorder %s108, %s110
      %p117 = scmp.eq.s32.totalorder %s20, 3
      %p118 = por %p116, %p117
      %p119 = scmp.ne.s32.totalorder %s110, %s111
      %p120 = scmp.eq.s32.totalorder %s20, 0
      %p121 = por %p119, %p120
      %p122 = scmp.ne.s32.totalorder %s110, %s111
      %p123 = scmp.eq.s32.totalorder %s21, 3
      %p124 = por %p122, %p123
      %p126 = scmp.ne.s32.totalorder %s111, %s125
      %p127 = scmp.eq.s32.totalorder %s21, 0
      %p128 = por %p126, %p127
      %s130 = sadd.s32 %s129, 1
      %p133 = scmp.eq.s32.totalorder %s15, 3
      %p134 = scmp.ne.s32.totalorder %s129, %s131
      %p135 = scmp.eq.s32.totalorder %s15, 0
      %p136 = por %p134, %p135
      %p137 = scmp.ne.s32.totalorder %s129, %s131
      %p138 = scmp.eq.s32.totalorder %s20, 3
      %p139 = por %p137, %p138
      %p140 = scmp.ne.s32.totalorder %s131, %s132
      %p141 = scmp.eq.s32.totalorder %s20, 0
      %p142 = por %p140, %p141
      %p143 = scmp.ne.s32.totalorder %s131, %s132
      %p144 = scmp.eq.s32.totalorder %s21, 3
      %p145 = por %p143, %p144
      %p147 = scmp.ne.s32.totalorder %s132, %s146
      %p148 = scmp.eq.s32.totalorder %s21, 0
      %p149 = por %p147, %p148
      %s151 = sadd.s32 %s150, 1
      %p154 = scmp.eq.s32.totalorder %s15, 3
      %p155 = scmp.ne.s32.totalorder %s150, %s152
      %p156 = scmp.eq.s32.totalorder %s15, 0
      %p157 = por %p155, %p156
      %p158 = scmp.ne.s32.totalorder %s150, %s152
      %p159 = scmp.eq.s32.totalorder %s20, 3
      %p160 = por %p158, %p159
      %p161 = scmp.ne.s32.totalorder %s152, %s153
      %p162 = scmp.eq.s32.totalorder %s20, 0
      %p163 = por %p161, %p162
      %p164 = scmp.ne.s32.totalorder %s152, %s153
      %p165 = scmp.eq.s32.totalorder %s21, 3
      %p166 = por %p164, %p165
      %p168 = scmp.ne.s32.totalorder %s153, %s167
      %p169 = scmp.eq.s32.totalorder %s21, 0
      %p170 = por %p168, %p169
      %s171 = ssub.s32 %s22, %s34
      %s172 = ssub.s32 %s23, %s30
      %s173 = sor.u32 %s171, %s172
      %p174 = scmp.eq.s32.totalorder %s173, 0
      %s176 = sadd.s32 %s175, 1
      %s177 = scalar_select %p174, %s175, %s176
      %p180 = pneg %p174
      %p181 = scmp.eq.s32.totalorder %s15, 3
      %p182 = por %p180, %p181
      %p183 = scmp.ne.s32.totalorder %s175, %s178
      %p184 = scmp.eq.s32.totalorder %s15, 0
      %p185 = por %p183, %p184
      %p186 = scmp.ne.s32.totalorder %s175, %s178
      %p187 = scmp.eq.s32.totalorder %s20, 3
      %p188 = por %p186, %p187
      %p189 = scmp.ne.s32.totalorder %s178, %s179
      %p190 = scmp.eq.s32.totalorder %s20, 0
      %p191 = por %p189, %p190
      %p192 = scmp.ne.s32.totalorder %s178, %s179
      %p193 = scmp.eq.s32.totalorder %s21, 3
      %p194 = por %p192, %p193
      %p196 = scmp.ne.s32.totalorder %s179, %s195
      %p197 = scmp.eq.s32.totalorder %s21, 0
      %p198 = por %p196, %p197
      %p199 = scmp.le.s32.totalorder 1, %s15
      %p200 = scmp.lt.s32.totalorder %s15, 5
      %p201 = pnand %p199, %p200
      %p202 = pneg %p201
      // Predicated region
      $region9: #{tpu_custom_call.1} parent=5 // pred_check
        _
      $region10: #{tpu_custom_call.1} parent=5 // pred_check_branch
        %204 = sbr.rel (%p201) target = $region12
      $region11: #{tpu_custom_call.1} parent=5 // pred_region
        %s205 = ssub.s32 %s15, 1
        // Predicated region
        $region13: #{tpu_custom_call.1} parent=11 // pred_check
          %p206 = pneg %p100
        $region14: #{tpu_custom_call.1} parent=11 // pred_check_branch
          %208 = sbr.rel (%p206) target = $region16
        $region15: #{tpu_custom_call.1} parent=11 // pred_region
          _
        $region16: #{tpu_custom_call.1} parent=11 // pred_fallthru
          _
        // Predicated region
        $region17: #{tpu_custom_call.1} parent=11 // pred_check
          %p209 = pneg %p121
        $region18: #{tpu_custom_call.1} parent=11 // pred_check_branch
          %211 = sbr.rel (%p209) target = $region20
        $region19: #{tpu_custom_call.1} parent=11 // pred_region
          _
        $region20: #{tpu_custom_call.1} parent=11 // pred_fallthru
          _
        // Predicated region
        $region21: #{tpu_custom_call.1} parent=11 // pred_check
          %p212 = pneg %p142
        $region22: #{tpu_custom_call.1} parent=11 // pred_check_branch
          %214 = sbr.rel (%p212) target = $region24
        $region23: #{tpu_custom_call.1} parent=11 // pred_region
          _
        $region24: #{tpu_custom_call.1} parent=11 // pred_fallthru
          _
        // Predicated region
        $region25: #{tpu_custom_call.1} parent=11 // pred_check
          %p215 = pneg %p163
        $region26: #{tpu_custom_call.1} parent=11 // pred_check_branch
          %217 = sbr.rel (%p215) target = $region28
        $region27: #{tpu_custom_call.1} parent=11 // pred_region
          _
        $region28: #{tpu_custom_call.1} parent=11 // pred_fallthru
          _
      $region12: #{tpu_custom_call.1} parent=5 // pred_fallthru
        _
      %p218 = scmp.lt.s32.totalorder %s15, 4
      // Predicated region
      $region29: #{tpu_custom_call.1} parent=5 // pred_check
        %p219 = pneg %p218
      $region30: #{tpu_custom_call.1} parent=5 // pred_check_branch
        %221 = sbr.rel (%p219) target = $region32
      $region31: #{tpu_custom_call.1} parent=5 // pred_region
        // Predicated region
        $region33: #{tpu_custom_call.1} parent=31 // pred_check
          %p222 = pneg %p47
        $region34: #{tpu_custom_call.1} parent=31 // pred_check_branch
          %224 = sbr.rel (%p222) target = $region36
        $region35: #{tpu_custom_call.1} parent=31 // pred_region
          %p225 = scmp.lt.s32.totalorder %s22, 1
          %s226 = scalar_select %p225, %s22, 1
          %s227 = smul.addr %s226, 54
          %s228 = smul.addr %s227, 4
          %s229 = scalar_lea.vmem %s0, %s228
        $region36: #{tpu_custom_call.1} parent=31 // pred_fallthru
          _
        // Predicated region
        $region37: #{tpu_custom_call.1} parent=31 // pred_check
          %p230 = pneg %p73
        $region38: #{tpu_custom_call.1} parent=31 // pred_check_branch
          %232 = sbr.rel (%p230) target = $region40
        $region39: #{tpu_custom_call.1} parent=31 // pred_region
          %p233 = scmp.lt.s32.totalorder %s22, 1
          %s234 = scalar_select %p233, %s22, 1
          %s235 = smul.addr %s234, 20
          %s236 = smul.addr %s235, 4
          %s237 = scalar_lea.vmem %s1, %s236
        $region40: #{tpu_custom_call.1} parent=31 // pred_fallthru
          _
      $region32: #{tpu_custom_call.1} parent=5 // pred_fallthru
        _
      %p238 = scmp.le.s32.totalorder 1, %s15
      %p239 = scmp.lt.s32.totalorder %s15, 5
      %p240 = pnand %p238, %p239
      %p241 = pneg %p240
      // Predicated region
      $region41: #{tpu_custom_call.1} parent=5 // pred_check
        _
      $region42: #{tpu_custom_call.1} parent=5 // pred_check_branch
        %243 = sbr.rel (%p240) target = $region44
      $region43: #{tpu_custom_call.1} parent=5 // pred_region
        %s244 = ssub.s32 %s15, 1
        %p245 = scmp.lt.s32.totalorder %s24, 1
        %s246 = scalar_select %p245, %s24, 1
        %s247 = smul.addr %s246, 54
        %s248 = smul.addr %s247, 4
        %s249 = scalar_lea.vmem %s0, %s248
        %p250 = pneg %p53
        %p251 = pneg %p50
        %p252 = scmp.lt.s32.totalorder %s24, 1
        %s253 = scalar_select %p252, %s24, 1
        %s254 = smul.addr %s253, 20
        %s255 = smul.addr %s254, 4
        %s256 = scalar_lea.vmem %s1, %s255
        %p257 = pneg %p79
        %p258 = pneg %p76
        %p259 = pneg %p100
        %p260 = pneg %p97
        %p261 = pneg %p121
        %p262 = pneg %p118
        %p263 = pneg %p142
        %p264 = pneg %p139
        %p265 = pneg %p163
        %p266 = pneg %p160
        %p267 = pneg %p191
        %p268 = pneg %p188
        %s269 = sand.u32 %s178, 1
        %s270 = scalar_lea.sflag [#allocation3], %s269
        %s271 = sand.u32 %s178, 1
        %s272 = smul.addr %s271, 128
        %s273 = scalar_lea.vmem [#allocation2], %s272
        %p274 = scmp.lt.s32.totalorder %s24, 1
        %s275 = scalar_select %p274, %s24, 1
        %s276 = smul.addr %s275, 54
        %s277 = smul.addr %s276, 4
        %s278 = scalar_lea.vmem %s0, %s277
        %p279 = scmp.lt.s32.totalorder %s24, 1
        %s280 = scalar_select %p279, %s24, 1
        %s281 = smul.addr %s280, 20
        %s282 = smul.addr %s281, 4
        %s283 = scalar_lea.vmem %s1, %s282
        %s284 = smul.u32 8, %s25
        %s286 = smul.u32 %s25, 8
        %s287 = smul.u32 %s25, 4
        %s288 = smul.u32 %s286, 3
        %s289 = smul.addr %s288, 4
        %s290 = scalar_lea.vmem %s278, %s289
        %v291 = vld [vmem:[%s290] sm:$0xf]
        %v292 = vld [vmem:[%s290 + $0x4] sm:$0xf]
        %v293 = vld [vmem:[%s290 + $0x8] sm:$0x1]
        %v294 = vld [vmem:[%s290 + $0xc] sm:$0xf]
        %v295 = vld [vmem:[%s290 + $0x10] sm:$0xf]
        %v296 = vld [vmem:[%s290 + $0x14] sm:$0x1]
        %v297 = vld [vmem:[%s290 + $0x18] sm:$0xf]
        %v298 = vld [vmem:[%s290 + $0x1c] sm:$0xf]
        %v299 = vld [vmem:[%s290 + $0x20] sm:$0x1]
        %v300 = vld [vmem:[%s290 + $0x24] sm:$0xf]
        %v301 = vld [vmem:[%s290 + $0x28] sm:$0xf]
        %v302 = vld [vmem:[%s290 + $0x2c] sm:$0x1]
        %v303 = vld [vmem:[%s290 + $0x30] sm:$0xf]
        %v304 = vld [vmem:[%s290 + $0x34] sm:$0xf]
        %v305 = vld [vmem:[%s290 + $0x38] sm:$0x1]
        %v306 = vld [vmem:[%s290 + $0x3c] sm:$0xf]
        %v307 = vld [vmem:[%s290 + $0x40] sm:$0xf]
        %v308 = vld [vmem:[%s290 + $0x44] sm:$0x1]
        %v309 = vld [vmem:[%s290 + $0x48] sm:$0xf]
        %v310 = vld [vmem:[%s290 + $0x4c] sm:$0xf]
        %v311 = vld [vmem:[%s290 + $0x50] sm:$0x1]
        %v312 = vld [vmem:[%s290 + $0x54] sm:$0xf]
        %v313 = vld [vmem:[%s290 + $0x58] sm:$0xf]
        %v314 = vld [vmem:[%s290 + $0x5c] sm:$0x1]
        %v315 = vld [vmem:[%s290 + $0x60] sm:$0xf]
        %v316 = vld [vmem:[%s290 + $0x64] sm:$0xf]
        %v317 = vld [vmem:[%s290 + $0x68] sm:$0x1]
        %v318 = vld [vmem:[%s290 + $0x6c] sm:$0xf]
        %v319 = vld [vmem:[%s290 + $0x70] sm:$0xf]
        %v320 = vld [vmem:[%s290 + $0x74] sm:$0x1]
        %s321 = smul.u32 %s287, 2
        %s322 = smul.addr %s321, 4
        %s323 = scalar_lea.vmem %s283, %s322
        %v324 = vld [vmem:[%s323] sm:$0xf]
        %v325 = vld [vmem:[%s323 + $0x4] sm:$0x1]
        %v326 = vld [vmem:[%s323 + $0x8] sm:$0xf]
        %v327 = vld [vmem:[%s323 + $0xc] sm:$0x1]
        %v328 = vld [vmem:[%s323 + $0x10] sm:$0xf]
        %v329 = vld [vmem:[%s323 + $0x14] sm:$0x1]
        %v330 = vld [vmem:[%s323 + $0x18] sm:$0xf]
        %v331 = vld [vmem:[%s323 + $0x1c] sm:$0x1]
        %v332 = vld [vmem:[%s323 + $0x20] sm:$0xf]
        %v333 = vld [vmem:[%s323 + $0x24] sm:$0x1]
        %v334 = vld [vmem:[%s323 + $0x28] sm:$0xf]
        %v335 = vld [vmem:[%s323 + $0x2c] sm:$0x1]
        %vm336 = vsmask.f32 3328
        %vm337 = vsmask.f32 7440
        %vm338 = vmor %vm336, %vm337
        %v340 = vshrl.u32 %v291, 16
        %v342 = vrot.slane %v340, 4
        %v343 = vshll.u32 %v291, 16
        %v345 = vrot.slane %v343, 5
        %v346 = vor.u32 %v342, %v345
        %v347 = vrot.slane %v346, 4
        %v349 = vshll.u32 %v292, 16
        %v351 = vrot.slane %v349, 5
        %v352 = vsel %vm338, %v347, %v351
        %v353 = vshrl.u32 %v292, 16
        %v355 = vrot.slane %v353, 4
        %v356 = vor.u32 %v355, %v351
        %v357 = vrot.slane %v356, 4
        %v359 = vshll.u32 %v293, 16
        %v361 = vrot.slane %v359, 5
        %v362 = vsel %vm338, %v357, %v361
        %v364 = vshrl.u32 %v294, 16
        %v366 = vrot.slane %v364, 4
        %v367 = vshll.u32 %v294, 16
        %v369 = vrot.slane %v367, 5
        %v370 = vor.u32 %v366, %v369
        %v371 = vrot.slane %v370, 4
        %v373 = vshll.u32 %v295, 16
        %v375 = vrot.slane %v373, 5
        %v376 = vsel %vm338, %v371, %v375
        %v377 = vshrl.u32 %v295, 16
        %v379 = vrot.slane %v377, 4
        %v380 = vor.u32 %v379, %v375
        %v381 = vrot.slane %v380, 4
        %v383 = vshll.u32 %v296, 16
        %v385 = vrot.slane %v383, 5
        %v386 = vsel %vm338, %v381, %v385
        %v388 = vshrl.u32 %v297, 16
        %v390 = vrot.slane %v388, 4
        %v391 = vshll.u32 %v297, 16
        %v393 = vrot.slane %v391, 5
        %v394 = vor.u32 %v390, %v393
        %v395 = vrot.slane %v394, 4
        %v397 = vshll.u32 %v298, 16
        %v399 = vrot.slane %v397, 5
        %v400 = vsel %vm338, %v395, %v399
        %v401 = vshrl.u32 %v298, 16
        %v403 = vrot.slane %v401, 4
        %v404 = vor.u32 %v403, %v399
        %v405 = vrot.slane %v404, 4
        %v407 = vshll.u32 %v299, 16
        %v409 = vrot.slane %v407, 5
        %v410 = vsel %vm338, %v405, %v409
        %v412 = vshrl.u32 %v300, 16
        %v414 = vrot.slane %v412, 4
        %v415 = vshll.u32 %v300, 16
        %v417 = vrot.slane %v415, 5
        %v418 = vor.u32 %v414, %v417
        %v419 = vrot.slane %v418, 4
        %v421 = vshll.u32 %v301, 16
        %v423 = vrot.slane %v421, 5
        %v424 = vsel %vm338, %v419, %v423
        %v425 = vshrl.u32 %v301, 16
        %v427 = vrot.slane %v425, 4
        %v428 = vor.u32 %v427, %v423
        %v429 = vrot.slane %v428, 4
        %v431 = vshll.u32 %v302, 16
        %v433 = vrot.slane %v431, 5
        %v434 = vsel %vm338, %v429, %v433
        %v436 = vshrl.u32 %v303, 16
        %v438 = vrot.slane %v436, 4
        %v439 = vshll.u32 %v303, 16
        %v441 = vrot.slane %v439, 5
        %v442 = vor.u32 %v438, %v441
        %v443 = vrot.slane %v442, 4
        %v445 = vshll.u32 %v304, 16
        %v447 = vrot.slane %v445, 5
        %v448 = vsel %vm338, %v443, %v447
        %v449 = vshrl.u32 %v304, 16
        %v451 = vrot.slane %v449, 4
        %v452 = vor.u32 %v451, %v447
        %v453 = vrot.slane %v452, 4
        %v455 = vshll.u32 %v305, 16
        %v457 = vrot.slane %v455, 5
        %v458 = vsel %vm338, %v453, %v457
        %v460 = vshrl.u32 %v306, 16
        %v462 = vrot.slane %v460, 4
        %v463 = vshll.u32 %v306, 16
        %v465 = vrot.slane %v463, 5
        %v466 = vor.u32 %v462, %v465
        %v467 = vrot.slane %v466, 4
        %v469 = vshll.u32 %v307, 16
        %v471 = vrot.slane %v469, 5
        %v472 = vsel %vm338, %v467, %v471
        %v473 = vshrl.u32 %v307, 16
        %v475 = vrot.slane %v473, 4
        %v476 = vor.u32 %v475, %v471
        %v477 = vrot.slane %v476, 4
        %v479 = vshll.u32 %v308, 16
        %v481 = vrot.slane %v479, 5
        %v482 = vsel %vm338, %v477, %v481
        %v484 = vshrl.u32 %v309, 16
        %v486 = vrot.slane %v484, 4
        %v487 = vshll.u32 %v309, 16
        %v489 = vrot.slane %v487, 5
        %v490 = vor.u32 %v486, %v489
        %v491 = vrot.slane %v490, 4
        %v493 = vshll.u32 %v310, 16
        %v495 = vrot.slane %v493, 5
        %v496 = vsel %vm338, %v491, %v495
        %v497 = vshrl.u32 %v310, 16
        %v499 = vrot.slane %v497, 4
        %v500 = vor.u32 %v499, %v495
        %v501 = vrot.slane %v500, 4
        %v503 = vshll.u32 %v311, 16
        %v505 = vrot.slane %v503, 5
        %v506 = vsel %vm338, %v501, %v505
        %v508 = vshrl.u32 %v312, 16
        %v510 = vrot.slane %v508, 4
        %v511 = vshll.u32 %v312, 16
        %v513 = vrot.slane %v511, 5
        %v514 = vor.u32 %v510, %v513
        %v515 = vrot.slane %v514, 4
        %v517 = vshll.u32 %v313, 16
        %v519 = vrot.slane %v517, 5
        %v520 = vsel %vm338, %v515, %v519
        %v521 = vshrl.u32 %v313, 16
        %v523 = vrot.slane %v521, 4
        %v524 = vor.u32 %v523, %v519
        %v525 = vrot.slane %v524, 4
        %v527 = vshll.u32 %v314, 16
        %v529 = vrot.slane %v527, 5
        %v530 = vsel %vm338, %v525, %v529
        %vm555 = vcmask 1042432
        %vm556 = vcmask 1046532
        %vm557 = vmor %vm555, %vm556
        %v558 = vrot.slane %v291, 5
        %v559 = vrot.slane %v558, 4
        %v560 = vrot.slane %v292, 5
        %v561 = vsel %vm557, %v559, %v560
        %v562 = vrot.slane %v560, 4
        %v563 = vrot.slane %v293, 5
        %v564 = vsel %vm557, %v562, %v563
        %v565 = vrot.slane %v294, 5
        %v566 = vrot.slane %v565, 4
        %v567 = vrot.slane %v295, 5
        %v568 = vsel %vm557, %v566, %v567
        %v569 = vrot.slane %v567, 4
        %v570 = vrot.slane %v296, 5
        %v571 = vsel %vm557, %v569, %v570
        %v572 = vrot.slane %v297, 5
        %v573 = vrot.slane %v572, 4
        %v574 = vrot.slane %v298, 5
        %v575 = vsel %vm557, %v573, %v574
        %v576 = vrot.slane %v574, 4
        %v577 = vrot.slane %v299, 5
        %v578 = vsel %vm557, %v576, %v577
        %v579 = vrot.slane %v300, 5
        %v580 = vrot.slane %v579, 4
        %v581 = vrot.slane %v301, 5
        %v582 = vsel %vm557, %v580, %v581
        %v583 = vrot.slane %v581, 4
        %v584 = vrot.slane %v302, 5
        %v585 = vsel %vm557, %v583, %v584
        %v586 = vrot.slane %v303, 5
        %v587 = vrot.slane %v586, 4
        %v588 = vrot.slane %v304, 5
        %v589 = vsel %vm557, %v587, %v588
        %v590 = vrot.slane %v588, 4
        %v591 = vrot.slane %v305, 5
        %v592 = vsel %vm557, %v590, %v591
        %v593 = vrot.slane %v306, 5
        %v594 = vrot.slane %v593, 4
        %v595 = vrot.slane %v307, 5
        %v596 = vsel %vm557, %v594, %v595
        %v597 = vrot.slane %v595, 4
        %v598 = vrot.slane %v308, 5
        %v599 = vsel %vm557, %v597, %v598
        %v600 = vrot.slane %v309, 5
        %v601 = vrot.slane %v600, 4
        %v602 = vrot.slane %v310, 5
        %v603 = vsel %vm557, %v601, %v602
        %v604 = vrot.slane %v602, 4
        %v605 = vrot.slane %v311, 5
        %v606 = vsel %vm557, %v604, %v605
        %v607 = vrot.slane %v312, 5
        %v608 = vrot.slane %v607, 4
        %v609 = vrot.slane %v313, 5
        %v610 = vsel %vm557, %v608, %v609
        %v611 = vrot.slane %v609, 4
        %v612 = vrot.slane %v314, 5
        %v613 = vsel %vm557, %v611, %v612
        %v615 = vshrl.u32 %v315, 16
        %v617 = vrot.slane %v615, 4
        %v618 = vshll.u32 %v315, 16
        %v620 = vrot.slane %v618, 5
        %v621 = vor.u32 %v617, %v620
        %v622 = vrot.slane %v621, 4
        %v624 = vshll.u32 %v316, 16
        %v626 = vrot.slane %v624, 5
        %v627 = vsel %vm338, %v622, %v626
        %v628 = vshrl.u32 %v316, 16
        %v630 = vrot.slane %v628, 4
        %v631 = vor.u32 %v630, %v626
        %v632 = vrot.slane %v631, 4
        %v634 = vshll.u32 %v317, 16
        %v636 = vrot.slane %v634, 5
        %v637 = vsel %vm338, %v632, %v636
        %v641 = vrot.slane %v315, 5
        %v642 = vrot.slane %v641, 4
        %v643 = vrot.slane %v316, 5
        %v644 = vsel %vm557, %v642, %v643
        %v645 = vrot.slane %v643, 4
        %v646 = vrot.slane %v317, 5
        %v647 = vsel %vm557, %v645, %v646
        %v649 = vshrl.u32 %v318, 16
        %v651 = vrot.slane %v649, 4
        %v652 = vshll.u32 %v318, 16
        %v654 = vrot.slane %v652, 5
        %v655 = vor.u32 %v651, %v654
        %v656 = vrot.slane %v655, 4
        %v658 = vshll.u32 %v319, 16
        %v660 = vrot.slane %v658, 5
        %v661 = vsel %vm338, %v656, %v660
        %v662 = vshrl.u32 %v319, 16
        %v664 = vrot.slane %v662, 4
        %v665 = vor.u32 %v664, %v660
        %v666 = vrot.slane %v665, 4
        %v668 = vshll.u32 %v320, 16
        %v670 = vrot.slane %v668, 5
        %v671 = vsel %vm338, %v666, %v670
        %v675 = vrot.slane %v318, 5
        %v676 = vrot.slane %v675, 4
        %v677 = vrot.slane %v319, 5
        %v678 = vsel %vm557, %v676, %v677
        %v679 = vrot.slane %v677, 4
        %v680 = vrot.slane %v320, 5
        %v681 = vsel %vm557, %v679, %v680
        %v682 = vunpack.c.l.b16 %v291
        %v683 = vunpack.c.l.b16 %v292
        %v684 = vunpack.c.l.b16 %v294
        %v685 = vunpack.c.l.b16 %v295
        %v686 = vunpack.c.l.b16 %v297
        %v687 = vunpack.c.l.b16 %v298
        %v688 = vunpack.c.l.b16 %v300
        %v689 = vunpack.c.l.b16 %v301
        %v690 = vunpack.c.l.b16 %v303
        %v691 = vunpack.c.l.b16 %v304
        %v692 = vunpack.c.l.b16 %v306
        %v693 = vunpack.c.l.b16 %v307
        %v694 = vunpack.c.l.b16 %v309
        %v695 = vunpack.c.l.b16 %v310
        %v696 = vunpack.c.l.b16 %v312
        %v697 = vunpack.c.l.b16 %v313
        %v698 = vpack.c.b16 %v683, %v682
        %v699 = vpack.c.b16 %v685, %v684
        %v700 = vpack.c.b16 %v687, %v686
        %v701 = vpack.c.b16 %v689, %v688
        %v702 = vpack.c.b16 %v691, %v690
        %v703 = vpack.c.b16 %v693, %v692
        %v704 = vpack.c.b16 %v695, %v694
        %v705 = vpack.c.b16 %v697, %v696
        %v706 = vunpack.c.l.b16 %v352
        %v707 = vunpack.c.l.b16 %v362
        %v708 = vunpack.c.l.b16 %v376
        %v709 = vunpack.c.l.b16 %v386
        %v710 = vunpack.c.l.b16 %v400
        %v711 = vunpack.c.l.b16 %v410
        %v712 = vunpack.c.l.b16 %v424
        %v713 = vunpack.c.l.b16 %v434
        %v714 = vunpack.c.l.b16 %v448
        %v715 = vunpack.c.l.b16 %v458
        %v716 = vunpack.c.l.b16 %v472
        %v717 = vunpack.c.l.b16 %v482
        %v718 = vunpack.c.l.b16 %v496
        %v719 = vunpack.c.l.b16 %v506
        %v720 = vunpack.c.l.b16 %v520
        %v721 = vunpack.c.l.b16 %v530
        %v722 = vpack.c.b16 %v707, %v706
        %v723 = vpack.c.b16 %v709, %v708
        %v724 = vpack.c.b16 %v711, %v710
        %v725 = vpack.c.b16 %v713, %v712
        %v726 = vpack.c.b16 %v715, %v714
        %v727 = vpack.c.b16 %v717, %v716
        %v728 = vpack.c.b16 %v719, %v718
        %v729 = vpack.c.b16 %v721, %v720
        %730 = vrot.lane.b32.xlu0 %v722, 2
        %v731 = vpop.permute.xlu0 %730
        %732 = vrot.lane.b32.xlu0 %v723, 2
        %v733 = vpop.permute.xlu0 %732
        %734 = vrot.lane.b32.xlu0 %v724, 2
        %v735 = vpop.permute.xlu0 %734
        %736 = vrot.lane.b32.xlu0 %v725, 2
        %v737 = vpop.permute.xlu0 %736
        %738 = vrot.lane.b32.xlu0 %v726, 2
        %v739 = vpop.permute.xlu0 %738
        %740 = vrot.lane.b32.xlu0 %v727, 2
        %v741 = vpop.permute.xlu0 %740
        %742 = vrot.lane.b32.xlu0 %v728, 2
        %v743 = vpop.permute.xlu0 %742
        %744 = vrot.lane.b32.xlu0 %v729, 2
        %v745 = vpop.permute.xlu0 %744
        %v746 = vunpack.c.l.b16 %v561
        %v747 = vunpack.c.l.b16 %v564
        %v748 = vunpack.c.l.b16 %v568
        %v749 = vunpack.c.l.b16 %v571
        %v750 = vunpack.c.l.b16 %v575
        %v751 = vunpack.c.l.b16 %v578
        %v752 = vunpack.c.l.b16 %v582
        %v753 = vunpack.c.l.b16 %v585
        %v754 = vunpack.c.l.b16 %v589
        %v755 = vunpack.c.l.b16 %v592
        %v756 = vunpack.c.l.b16 %v596
        %v757 = vunpack.c.l.b16 %v599
        %v758 = vunpack.c.l.b16 %v603
        %v759 = vunpack.c.l.b16 %v606
        %v760 = vunpack.c.l.b16 %v610
        %v761 = vunpack.c.l.b16 %v613
        %v762 = vpack.c.b16 %v747, %v746
        %v763 = vpack.c.b16 %v749, %v748
        %v764 = vpack.c.b16 %v751, %v750
        %v765 = vpack.c.b16 %v753, %v752
        %v766 = vpack.c.b16 %v755, %v754
        %v767 = vpack.c.b16 %v757, %v756
        %v768 = vpack.c.b16 %v759, %v758
        %v769 = vpack.c.b16 %v761, %v760
        %770 = vrot.lane.b32.xlu0 %v762, 4
        %v771 = vpop.permute.xlu0 %770
        %772 = vrot.lane.b32.xlu0 %v763, 4
        %v773 = vpop.permute.xlu0 %772
        %774 = vrot.lane.b32.xlu0 %v764, 4
        %v775 = vpop.permute.xlu0 %774
        %776 = vrot.lane.b32.xlu0 %v765, 4
        %v777 = vpop.permute.xlu0 %776
        %778 = vrot.lane.b32.xlu0 %v766, 4
        %v779 = vpop.permute.xlu0 %778
        %780 = vrot.lane.b32.xlu0 %v767, 4
        %v781 = vpop.permute.xlu0 %780
        %782 = vrot.lane.b32.xlu0 %v768, 4
        %v783 = vpop.permute.xlu0 %782
        %784 = vrot.lane.b32.xlu0 %v769, 4
        %v785 = vpop.permute.xlu0 %784
        %v786 = vunpack.c.l.b16 %v315
        %v787 = vunpack.c.l.b16 %v316
        %v788 = vpack.c.b16 %v787, %v786
        %789 = vrot.lane.b32.xlu0 %v699, 6
        %v790 = vpop.permute.xlu0 %789
        %791 = vrot.lane.b32.xlu0 %v700, 6
        %v792 = vpop.permute.xlu0 %791
        %793 = vrot.lane.b32.xlu0 %v701, 6
        %v794 = vpop.permute.xlu0 %793
        %795 = vrot.lane.b32.xlu0 %v702, 6
        %v796 = vpop.permute.xlu0 %795
        %797 = vrot.lane.b32.xlu0 %v703, 6
        %v798 = vpop.permute.xlu0 %797
        %799 = vrot.lane.b32.xlu0 %v704, 6
        %v800 = vpop.permute.xlu0 %799
        %801 = vrot.lane.b32.xlu0 %v705, 6
        %v802 = vpop.permute.xlu0 %801
        %803 = vrot.lane.b32.xlu0 %v788, 6
        %v804 = vpop.permute.xlu0 %803
        %v805 = vunpack.c.l.b16 %v627
        %v806 = vunpack.c.l.b16 %v637
        %v807 = vpack.c.b16 %v806, %v805
        %808 = vrot.lane.b32.xlu0 %v723, 8
        %v809 = vpop.permute.xlu0 %808
        %810 = vrot.lane.b32.xlu0 %v724, 8
        %v811 = vpop.permute.xlu0 %810
        %812 = vrot.lane.b32.xlu0 %v725, 8
        %v813 = vpop.permute.xlu0 %812
        %814 = vrot.lane.b32.xlu0 %v726, 8
        %v815 = vpop.permute.xlu0 %814
        %816 = vrot.lane.b32.xlu0 %v727, 8
        %v817 = vpop.permute.xlu0 %816
        %818 = vrot.lane.b32.xlu0 %v728, 8
        %v819 = vpop.permute.xlu0 %818
        %820 = vrot.lane.b32.xlu0 %v729, 8
        %v821 = vpop.permute.xlu0 %820
        %822 = vrot.lane.b32.xlu0 %v807, 8
        %v823 = vpop.permute.xlu0 %822
        %v824 = vunpack.c.l.b16 %v644
        %v825 = vunpack.c.l.b16 %v647
        %v826 = vpack.c.b16 %v825, %v824
        %827 = vrot.lane.b32.xlu0 %v763, 10
        %v828 = vpop.permute.xlu0 %827
        %829 = vrot.lane.b32.xlu0 %v764, 10
        %v830 = vpop.permute.xlu0 %829
        %831 = vrot.lane.b32.xlu0 %v765, 10
        %v832 = vpop.permute.xlu0 %831
        %833 = vrot.lane.b32.xlu0 %v766, 10
        %v834 = vpop.permute.xlu0 %833
        %835 = vrot.lane.b32.xlu0 %v767, 10
        %v836 = vpop.permute.xlu0 %835
        %837 = vrot.lane.b32.xlu0 %v768, 10
        %v838 = vpop.permute.xlu0 %837
        %839 = vrot.lane.b32.xlu0 %v769, 10
        %v840 = vpop.permute.xlu0 %839
        %841 = vrot.lane.b32.xlu0 %v826, 10
        %v842 = vpop.permute.xlu0 %841
        %v843 = vunpack.c.l.b16 %v318
        %v844 = vunpack.c.l.b16 %v319
        %v845 = vpack.c.b16 %v844, %v843
        %846 = vrot.lane.b32.xlu0 %v700, 12
        %v847 = vpop.permute.xlu0 %846
        %848 = vrot.lane.b32.xlu0 %v701, 12
        %v849 = vpop.permute.xlu0 %848
        %850 = vrot.lane.b32.xlu0 %v702, 12
        %v851 = vpop.permute.xlu0 %850
        %852 = vrot.lane.b32.xlu0 %v703, 12
        %v853 = vpop.permute.xlu0 %852
        %854 = vrot.lane.b32.xlu0 %v704, 12
        %v855 = vpop.permute.xlu0 %854
        %856 = vrot.lane.b32.xlu0 %v705, 12
        %v857 = vpop.permute.xlu0 %856
        %858 = vrot.lane.b32.xlu0 %v788, 12
        %v859 = vpop.permute.xlu0 %858
        %860 = vrot.lane.b32.xlu0 %v845, 12
        %v861 = vpop.permute.xlu0 %860
        %v862 = vunpack.c.l.b16 %v661
        %v863 = vunpack.c.l.b16 %v671
        %v864 = vpack.c.b16 %v863, %v862
        %865 = vrot.lane.b32.xlu0 %v724, 14
        %v866 = vpop.permute.xlu0 %865
        %867 = vrot.lane.b32.xlu0 %v725, 14
        %v868 = vpop.permute.xlu0 %867
        %869 = vrot.lane.b32.xlu0 %v726, 14
        %v870 = vpop.permute.xlu0 %869
        %871 = vrot.lane.b32.xlu0 %v727, 14
        %v872 = vpop.permute.xlu0 %871
        %873 = vrot.lane.b32.xlu0 %v728, 14
        %v874 = vpop.permute.xlu0 %873
        %875 = vrot.lane.b32.xlu0 %v729, 14
        %v876 = vpop.permute.xlu0 %875
        %877 = vrot.lane.b32.xlu0 %v807, 14
        %v878 = vpop.permute.xlu0 %877
        %879 = vrot.lane.b32.xlu0 %v864, 14
        %v880 = vpop.permute.xlu0 %879
        %v881 = vunpack.c.l.b16 %v678
        %v882 = vunpack.c.l.b16 %v681
        %v883 = vpack.c.b16 %v882, %v881
        %884 = vrot.lane.b32.xlu0 %v764, 16
        %v885 = vpop.permute.xlu0 %884
        %886 = vrot.lane.b32.xlu0 %v765, 16
        %v887 = vpop.permute.xlu0 %886
        %888 = vrot.lane.b32.xlu0 %v766, 16
        %v889 = vpop.permute.xlu0 %888
        %890 = vrot.lane.b32.xlu0 %v767, 16
        %v891 = vpop.permute.xlu0 %890
        %892 = vrot.lane.b32.xlu0 %v768, 16
        %v893 = vpop.permute.xlu0 %892
        %894 = vrot.lane.b32.xlu0 %v769, 16
        %v895 = vpop.permute.xlu0 %894
        %896 = vrot.lane.b32.xlu0 %v826, 16
        %v897 = vpop.permute.xlu0 %896
        %898 = vrot.lane.b32.xlu0 %v883, 16
        %v899 = vpop.permute.xlu0 %898
        %vm900 = vcmask 15360
        %v903 = vsel %vm900, %v698, %v731
        %v906 = vsel %vm900, %v699, %v733
        %v909 = vsel %vm900, %v700, %v735
        %v912 = vsel %vm900, %v701, %v737
        %v915 = vsel %vm900, %v702, %v739
        %v918 = vsel %vm900, %v703, %v741
        %v921 = vsel %vm900, %v704, %v743
        %v924 = vsel %vm900, %v705, %v745
        %vm925 = vcmask 31744
        %v927 = vsel %vm925, %v903, %v771
        %v929 = vsel %vm925, %v906, %v773
        %v931 = vsel %vm925, %v909, %v775
        %v933 = vsel %vm925, %v912, %v777
        %v935 = vsel %vm925, %v915, %v779
        %v937 = vsel %vm925, %v918, %v781
        %v939 = vsel %vm925, %v921, %v783
        %v941 = vsel %vm925, %v924, %v785
        %vm942 = vcmask 48128
        %v944 = vsel %vm942, %v927, %v790
        %v946 = vsel %vm942, %v929, %v792
        %v948 = vsel %vm942, %v931, %v794
        %v950 = vsel %vm942, %v933, %v796
        %v952 = vsel %vm942, %v935, %v798
        %v954 = vsel %vm942, %v937, %v800
        %v956 = vsel %vm942, %v939, %v802
        %v958 = vsel %vm942, %v941, %v804
        %vm959 = vcmask 64512
        %v961 = vsel %vm959, %v944, %v809
        %v963 = vsel %vm959, %v946, %v811
        %v965 = vsel %vm959, %v948, %v813
        %v967 = vsel %vm959, %v950, %v815
        %v969 = vsel %vm959, %v952, %v817
        %v971 = vsel %vm959, %v954, %v819
        %v973 = vsel %vm959, %v956, %v821
        %v975 = vsel %vm959, %v958, %v823
        %vm976 = vcmask 80896
        %v978 = vsel %vm976, %v961, %v828
        %v980 = vsel %vm976, %v963, %v830
        %v982 = vsel %vm976, %v965, %v832
        %v984 = vsel %vm976, %v967, %v834
        %v986 = vsel %vm976, %v969, %v836
        %v988 = vsel %vm976, %v971, %v838
        %v990 = vsel %vm976, %v973, %v840
        %v992 = vsel %vm976, %v975, %v842
        %vm993 = vcmask 97280
        %v995 = vsel %vm993, %v978, %v847
        %v997 = vsel %vm993, %v980, %v849
        %v999 = vsel %vm993, %v982, %v851
        %v1001 = vsel %vm993, %v984, %v853
        %v1003 = vsel %vm993, %v986, %v855
        %v1005 = vsel %vm993, %v988, %v857
        %v1007 = vsel %vm993, %v990, %v859
        %v1009 = vsel %vm993, %v992, %v861
        %vm1010 = vcmask 113664
        %v1012 = vsel %vm1010, %v995, %v866
        %v1014 = vsel %vm1010, %v997, %v868
        %v1016 = vsel %vm1010, %v999, %v870
        %v1018 = vsel %vm1010, %v1001, %v872
        %v1020 = vsel %vm1010, %v1003, %v874
        %v1022 = vsel %vm1010, %v1005, %v876
        %v1024 = vsel %vm1010, %v1007, %v878
        %v1026 = vsel %vm1010, %v1009, %v880
        %vm1027 = vcmask 130048
        %v1029 = vsel %vm1027, %v1012, %v885
        %v1031 = vsel %vm1027, %v1014, %v887
        %v1033 = vsel %vm1027, %v1016, %v889
        %v1035 = vsel %vm1027, %v1018, %v891
        %v1037 = vsel %vm1027, %v1020, %v893
        %v1039 = vsel %vm1027, %v1022, %v895
        %v1041 = vsel %vm1027, %v1024, %v897
        %v1043 = vsel %vm1027, %v1026, %v899
        %v1045 = vshrl.u32 %v324, 16
        %v1047 = vrot.slane %v1045, 4
        %v1048 = vshll.u32 %v324, 16
        %v1050 = vrot.slane %v1048, 5
        %v1051 = vor.u32 %v1047, %v1050
        %v1052 = vrot.slane %v1051, 4
        %v1054 = vshll.u32 %v325, 16
        %v1056 = vrot.slane %v1054, 5
        %v1057 = vsel %vm338, %v1052, %v1056
        %v1059 = vshrl.u32 %v326, 16
        %v1061 = vrot.slane %v1059, 4
        %v1062 = vshll.u32 %v326, 16
        %v1064 = vrot.slane %v1062, 5
        %v1065 = vor.u32 %v1061, %v1064
        %v1066 = vrot.slane %v1065, 4
        %v1068 = vshll.u32 %v327, 16
        %v1070 = vrot.slane %v1068, 5
        %v1071 = vsel %vm338, %v1066, %v1070
        %v1073 = vshrl.u32 %v328, 16
        %v1075 = vrot.slane %v1073, 4
        %v1076 = vshll.u32 %v328, 16
        %v1078 = vrot.slane %v1076, 5
        %v1079 = vor.u32 %v1075, %v1078
        %v1080 = vrot.slane %v1079, 4
        %v1082 = vshll.u32 %v329, 16
        %v1084 = vrot.slane %v1082, 5
        %v1085 = vsel %vm338, %v1080, %v1084
        %v1087 = vshrl.u32 %v330, 16
        %v1089 = vrot.slane %v1087, 4
        %v1090 = vshll.u32 %v330, 16
        %v1092 = vrot.slane %v1090, 5
        %v1093 = vor.u32 %v1089, %v1092
        %v1094 = vrot.slane %v1093, 4
        %v1096 = vshll.u32 %v331, 16
        %v1098 = vrot.slane %v1096, 5
        %v1099 = vsel %vm338, %v1094, %v1098
        %v1108 = vrot.slane %v324, 5
        %v1109 = vrot.slane %v1108, 4
        %v1110 = vrot.slane %v325, 5
        %v1111 = vsel %vm557, %v1109, %v1110
        %v1112 = vrot.slane %v326, 5
        %v1113 = vrot.slane %v1112, 4
        %v1114 = vrot.slane %v327, 5
        %v1115 = vsel %vm557, %v1113, %v1114
        %v1116 = vrot.slane %v328, 5
        %v1117 = vrot.slane %v1116, 4
        %v1118 = vrot.slane %v329, 5
        %v1119 = vsel %vm557, %v1117, %v1118
        %v1120 = vrot.slane %v330, 5
        %v1121 = vrot.slane %v1120, 4
        %v1122 = vrot.slane %v331, 5
        %v1123 = vsel %vm557, %v1121, %v1122
        %v1125 = vshrl.u32 %v332, 16
        %v1127 = vrot.slane %v1125, 4
        %v1128 = vshll.u32 %v332, 16
        %v1130 = vrot.slane %v1128, 5
        %v1131 = vor.u32 %v1127, %v1130
        %v1132 = vrot.slane %v1131, 4
        %v1134 = vshll.u32 %v333, 16
        %v1136 = vrot.slane %v1134, 5
        %v1137 = vsel %vm338, %v1132, %v1136
        %v1140 = vrot.slane %v332, 5
        %v1141 = vrot.slane %v1140, 4
        %v1142 = vrot.slane %v333, 5
        %v1143 = vsel %vm557, %v1141, %v1142
        %v1145 = vshrl.u32 %v334, 16
        %v1147 = vrot.slane %v1145, 4
        %v1148 = vshll.u32 %v334, 16
        %v1150 = vrot.slane %v1148, 5
        %v1151 = vor.u32 %v1147, %v1150
        %v1152 = vrot.slane %v1151, 4
        %v1154 = vshll.u32 %v335, 16
        %v1156 = vrot.slane %v1154, 5
        %v1157 = vsel %vm338, %v1152, %v1156
        %v1160 = vrot.slane %v334, 5
        %v1161 = vrot.slane %v1160, 4
        %v1162 = vrot.slane %v335, 5
        %v1163 = vsel %vm557, %v1161, %v1162
        %v1164 = vunpack.c.l.b16 %v324
        %v1165 = vunpack.c.l.b16 %v326
        %v1166 = vunpack.c.l.b16 %v328
        %v1167 = vunpack.c.l.b16 %v330
        %v1168 = vpack.c.b16 %v1165, %v1164
        %v1169 = vpack.c.b16 %v1167, %v1166
        %v1170 = vunpack.c.l.b16 %v1057
        %v1171 = vunpack.c.l.b16 %v1071
        %v1172 = vunpack.c.l.b16 %v1085
        %v1173 = vunpack.c.l.b16 %v1099
        %v1174 = vpack.c.b16 %v1171, %v1170
        %v1175 = vpack.c.b16 %v1173, %v1172
        %1176 = vrot.lane.b32.xlu0 %v1174, 2
        %v1177 = vpop.permute.xlu0 %1176
        %1178 = vrot.lane.b32.xlu0 %v1175, 2
        %v1179 = vpop.permute.xlu0 %1178
        %v1180 = vunpack.c.l.b16 %v1111
        %v1181 = vunpack.c.l.b16 %v1115
        %v1182 = vunpack.c.l.b16 %v1119
        %v1183 = vunpack.c.l.b16 %v1123
        %v1184 = vpack.c.b16 %v1181, %v1180
        %v1185 = vpack.c.b16 %v1183, %v1182
        %1186 = vrot.lane.b32.xlu0 %v1184, 4
        %v1187 = vpop.permute.xlu0 %1186
        %1188 = vrot.lane.b32.xlu0 %v1185, 4
        %v1189 = vpop.permute.xlu0 %1188
        %v1190 = vunpack.c.l.b16 %v332
        %v1191 = vpack.c.b16 %v1166, %v1165
        %v1192 = vpack.c.b16 %v1190, %v1167
        %1193 = vrot.lane.b32.xlu0 %v1191, 6
        %v1194 = vpop.permute.xlu0 %1193
        %1195 = vrot.lane.b32.xlu0 %v1192, 6
        %v1196 = vpop.permute.xlu0 %1195
        %v1197 = vunpack.c.l.b16 %v1137
        %v1198 = vpack.c.b16 %v1172, %v1171
        %v1199 = vpack.c.b16 %v1197, %v1173
        %1200 = vrot.lane.b32.xlu0 %v1198, 8
        %v1201 = vpop.permute.xlu0 %1200
        %1202 = vrot.lane.b32.xlu0 %v1199, 8
        %v1203 = vpop.permute.xlu0 %1202
        %v1204 = vunpack.c.l.b16 %v1143
        %v1205 = vpack.c.b16 %v1182, %v1181
        %v1206 = vpack.c.b16 %v1204, %v1183
        %1207 = vrot.lane.b32.xlu0 %v1205, 10
        %v1208 = vpop.permute.xlu0 %1207
        %1209 = vrot.lane.b32.xlu0 %v1206, 10
        %v1210 = vpop.permute.xlu0 %1209
        %v1211 = vunpack.c.l.b16 %v334
        %v1212 = vpack.c.b16 %v1211, %v1190
        %1213 = vrot.lane.b32.xlu0 %v1169, 12
        %v1214 = vpop.permute.xlu0 %1213
        %1215 = vrot.lane.b32.xlu0 %v1212, 12
        %v1216 = vpop.permute.xlu0 %1215
        %v1217 = vunpack.c.l.b16 %v1157
        %v1218 = vpack.c.b16 %v1217, %v1197
        %1219 = vrot.lane.b32.xlu0 %v1175, 14
        %v1220 = vpop.permute.xlu0 %1219
        %1221 = vrot.lane.b32.xlu0 %v1218, 14
        %v1222 = vpop.permute.xlu0 %1221
        %v1223 = vunpack.c.l.b16 %v1163
        %v1224 = vpack.c.b16 %v1223, %v1204
        %1225 = vrot.lane.b32.xlu0 %v1185, 16
        %v1226 = vpop.permute.xlu0 %1225
        %1227 = vrot.lane.b32.xlu0 %v1224, 16
        %v1228 = vpop.permute.xlu0 %1227
        %v1231 = vsel %vm900, %v1168, %v1177
        %v1234 = vsel %vm900, %v1169, %v1179
        %v1236 = vsel %vm925, %v1231, %v1187
        %v1238 = vsel %vm925, %v1234, %v1189
        %v1240 = vsel %vm942, %v1236, %v1194
        %v1242 = vsel %vm942, %v1238, %v1196
        %v1244 = vsel %vm959, %v1240, %v1201
        %v1246 = vsel %vm959, %v1242, %v1203
        %v1248 = vsel %vm976, %v1244, %v1208
        %v1250 = vsel %vm976, %v1246, %v1210
        %v1252 = vsel %vm993, %v1248, %v1214
        %v1254 = vsel %vm993, %v1250, %v1216
        %v1256 = vsel %vm1010, %v1252, %v1220
        %v1258 = vsel %vm1010, %v1254, %v1222
        %v1260 = vsel %vm1027, %v1256, %v1226
        %v1262 = vsel %vm1027, %v1258, %v1228
        %v1263 = vld [vmem:[%s2] sm:$0xf]
        %v1264 = vld [vmem:[%s2 + $0x4] sm:$0xf]
        %v1265 = vld [vmem:[%s2 + $0x8] sm:$0x1]
        %v1269 = vunpack.c.l.b16 %v1263
        %v1270 = vunpack.c.l.b16 %v1264
        %v1271 = vunpack.c.l.b16 %v1265
        %v1272 = vpack.c.b16 %v1270, %v1269
        %v1273 = vpack.c.b16 %v1271, %v1271
        %vm1275 = vcmask 146432
        %v1276 = vsel %vm1275, %v1029, 0
        %v1278 = vsel %vm1275, %v1031, 0
        %v1280 = vsel %vm1275, %v1033, 0
        %v1282 = vsel %vm1275, %v1035, 0
        %v1284 = vsel %vm1275, %v1037, 0
        %v1286 = vsel %vm1275, %v1039, 0
        %v1288 = vsel %vm1275, %v1041, 0
        %v1290 = vsel %vm1275, %v1043, 0
        %vm1292 = vcmask 1040384
        %v1294 = vsel %vm1292, %v1273, 0
        %1296 = vmatprep.subr.bf16.mxu0 0
        %1297 = vmatpush1.bf16.msra.mxu0 %v1272
        %1298 = vmatprep.subr.bf16.mxu0 0
        %1299 = vmatpush1.bf16.msra.mxu0 %v1294
        %1300 = vmatprep.subr.bf16.mxu0 0
        %1301 = vmatpush1.bf16.msra.mxu0 0
        %1302 = vmatprep.subr.bf16.mxu0 0
        %1303 = vmatpush1.bf16.msra.mxu0 0
        %1304 = vmatprep.subr.bf16.mxu0 0
        %1305 = vmatpush1.bf16.msra.mxu0 0
        %1306 = vmatprep.subr.bf16.mxu0 0
        %1307 = vmatpush1.bf16.msra.mxu0 0
        %1308 = vmatprep.subr.bf16.mxu0 0
        %1309 = vmatpush1.bf16.msra.mxu0 0
        %1310 = vmatprep.subr.bf16.mxu0 0
        %1311 = vmatpush1.bf16.msra.mxu0 0
        %1312 = vmatprep.subr.bf16.mxu0 0
        %1313 = vmatpush1.bf16.msra.mxu0 0
        %1314 = vmatprep.subr.bf16.mxu0 0
        %1315 = vmatpush1.bf16.msra.mxu0 0
        %1316 = vmatprep.subr.bf16.mxu0 0
        %1317 = vmatpush1.bf16.msra.mxu0 0
        %1318 = vmatprep.subr.bf16.mxu0 0
        %1319 = vmatpush1.bf16.msra.mxu0 0
        %1320 = vmatprep.subr.bf16.mxu0 0
        %1321 = vmatpush1.bf16.msra.mxu0 0
        %1322 = vmatprep.subr.bf16.mxu0 0
        %1323 = vmatpush1.bf16.msra.mxu0 0
        %1324 = vmatprep.subr.bf16.mxu0 0
        %1325 = vmatpush1.bf16.msra.mxu0 0
        %1326 = vmatprep.subr.bf16.mxu0 0
        %1327 = vmatpush1.bf16.msra.mxu0 0
        %1328 = vmatprep.mubr.bf16.mxu0 0
        %1329 = vmatmul.mubr.bf16.gmra.mrb[0].mxu0 %v1276
        %v1330 = vpop.f32.mrb[0].mxu0
        %v1331 = vadd.f32 0.0, %v1330
        %v1332 = vpop.f32.mrb[0].mxu0
        %v1333 = vpop.f32.mrb[0].mxu0
        %v1334 = vadd.f32 0.0, %v1333
        %v1335 = vpop.f32.mrb[0].mxu0
        %1336 = vmatprep.mubr.bf16.mxu0 0
        %1337 = vmatmul.mubr.bf16.gmra.mrb[0].mxu0 %v1278
        %v1338 = vpop.f32.mrb[0].mxu0
        %v1339 = vadd.f32 0.0, %v1338
        %v1340 = vpop.f32.mrb[0].mxu0
        %v1341 = vpop.f32.mrb[0].mxu0
        %v1342 = vadd.f32 0.0, %v1341
        %v1343 = vpop.f32.mrb[0].mxu0
        %1344 = vmatprep.mubr.bf16.mxu0 0
        %1345 = vmatmul.mubr.bf16.gmra.mrb[0].mxu0 %v1280
        %v1346 = vpop.f32.mrb[0].mxu0
        %v1347 = vadd.f32 0.0, %v1346
        %v1348 = vpop.f32.mrb[0].mxu0
        %v1349 = vpop.f32.mrb[0].mxu0
        %v1350 = vadd.f32 0.0, %v1349
        %v1351 = vpop.f32.mrb[0].mxu0
        %1352 = vmatprep.mubr.bf16.mxu0 0
        %1353 = vmatmul.mubr.bf16.gmra.mrb[0].mxu0 %v1282
        %v1354 = vpop.f32.mrb[0].mxu0
        %v1355 = vadd.f32 0.0, %v1354
        %v1356 = vpop.f32.mrb[0].mxu0
        %v1357 = vpop.f32.mrb[0].mxu0
        %v1358 = vadd.f32 0.0, %v1357
        %v1359 = vpop.f32.mrb[0].mxu0
        %1360 = vmatprep.mubr.bf16.mxu0 0
        %1361 = vmatmul.mubr.bf16.gmra.mrb[0].mxu0 %v1284
        %v1362 = vpop.f32.mrb[0].mxu0
        %v1363 = vadd.f32 0.0, %v1362
        %v1364 = vpop.f32.mrb[0].mxu0
        %v1365 = vpop.f32.mrb[0].mxu0
        %v1366 = vadd.f32 0.0, %v1365
        %v1367 = vpop.f32.mrb[0].mxu0
        %1368 = vmatprep.mubr.bf16.mxu0 0
        %1369 = vmatmul.mubr.bf16.gmra.mrb[0].mxu0 %v1286
        %v1370 = vpop.f32.mrb[0].mxu0
        %v1371 = vadd.f32 0.0, %v1370
        %v1372 = vpop.f32.mrb[0].mxu0
        %v1373 = vpop.f32.mrb[0].mxu0
        %v1374 = vadd.f32 0.0, %v1373
        %v1375 = vpop.f32.mrb[0].mxu0
        %1376 = vmatprep.mubr.bf16.mxu0 0
        %1377 = vmatmul.mubr.bf16.gmra.mrb[0].mxu0 %v1288
        %v1378 = vpop.f32.mrb[0].mxu0
        %v1379 = vadd.f32 0.0, %v1378
        %v1380 = vpop.f32.mrb[0].mxu0
        %v1381 = vpop.f32.mrb[0].mxu0
        %v1382 = vadd.f32 0.0, %v1381
        %v1383 = vpop.f32.mrb[0].mxu0
        %1384 = vmatprep.mubr.bf16.mxu0 0
        %1385 = vmatmul.mubr.bf16.gmra.mrb[0].mxu0 %v1290
        %v1386 = vpop.f32.mrb[0].mxu0
        %v1387 = vadd.f32 0.0, %v1386
        %v1388 = vpop.f32.mrb[0].mxu0
        %v1389 = vpop.f32.mrb[0].mxu0
        %v1390 = vadd.f32 0.0, %v1389
        %v1391 = vpop.f32.mrb[0].mxu0
        %1392 = vdwg.mxu0
        %v1393 = vld [vmem:[%s3] sm:$0xf]
        %v1394 = vld [vmem:[%s3 + $0x4] sm:$0xf]
        %v1395 = vld [vmem:[%s3 + $0x8] sm:$0x1]
        %v1399 = vunpack.c.l.b16 %v1393
        %v1400 = vunpack.c.l.b16 %v1394
        %v1401 = vunpack.c.l.b16 %v1395
        %v1402 = vpack.c.b16 %v1400, %v1399
        %v1403 = vpack.c.b16 %v1401, %v1401
        %v1405 = vsel %vm1275, %v1260, 0
        %v1407 = vsel %vm1275, %v1262, 0
        %v1410 = vsel %vm1292, %v1403, 0
        %1412 = vmatprep.subr.bf16.mxu0 0
        %1413 = vmatpush1.bf16.msra.mxu0 %v1402
        %1414 = vmatprep.subr.bf16.mxu0 0
        %1415 = vmatpush1.bf16.msra.mxu0 %v1410
        %1416 = vmatprep.subr.bf16.mxu0 0
        %1417 = vmatpush1.bf16.msra.mxu0 0
        %1418 = vmatprep.subr.bf16.mxu0 0
        %1419 = vmatpush1.bf16.msra.mxu0 0
        %1420 = vmatprep.subr.bf16.mxu0 0
        %1421 = vmatpush1.bf16.msra.mxu0 0
        %1422 = vmatprep.subr.bf16.mxu0 0
        %1423 = vmatpush1.bf16.msra.mxu0 0
        %1424 = vmatprep.subr.bf16.mxu0 0
        %1425 = vmatpush1.bf16.msra.mxu0 0
        %1426 = vmatprep.subr.bf16.mxu0 0
        %1427 = vmatpush1.bf16.msra.mxu0 0
        %1428 = vmatprep.subr.bf16.mxu0 0
        %1429 = vmatpush1.bf16.msra.mxu0 0
        %1430 = vmatprep.subr.bf16.mxu0 0
        %1431 = vmatpush1.bf16.msra.mxu0 0
        %1432 = vmatprep.subr.bf16.mxu0 0
        %1433 = vmatpush1.bf16.msra.mxu0 0
        %1434 = vmatprep.subr.bf16.mxu0 0
        %1435 = vmatpush1.bf16.msra.mxu0 0
        %1436 = vmatprep.subr.bf16.mxu0 0
        %1437 = vmatpush1.bf16.msra.mxu0 0
        %1438 = vmatprep.subr.bf16.mxu0 0
        %1439 = vmatpush1.bf16.msra.mxu0 0
        %1440 = vmatprep.subr.bf16.mxu0 0
        %1441 = vmatpush1.bf16.msra.mxu0 0
        %1442 = vmatprep.subr.bf16.mxu0 0
        %1443 = vmatpush1.bf16.msra.mxu0 0
        %1444 = vmatprep.mubr.bf16.mxu0 0
        %1445 = vmatmul.mubr.bf16.gmra.mrb[0].mxu0 %v1405
        %v1446 = vpop.f32.mrb[0].mxu0
        %v1447 = vadd.f32 0.0, %v1446
        %v1448 = vpop.f32.mrb[0].mxu0
        %v1449 = vpop.f32.mrb[0].mxu0
        %v1450 = vadd.f32 0.0, %v1449
        %v1451 = vpop.f32.mrb[0].mxu0
        %1452 = vmatprep.mubr.bf16.mxu0 0
        %1453 = vmatmul.mubr.bf16.gmra.mrb[0].mxu0 %v1407
        %v1454 = vpop.f32.mrb[0].mxu0
        %v1455 = vadd.f32 0.0, %v1454
        %v1456 = vpop.f32.mrb[0].mxu0
        %v1457 = vpop.f32.mrb[0].mxu0
        %v1458 = vadd.f32 0.0, %v1457
        %v1459 = vpop.f32.mrb[0].mxu0
        %1460 = vdwg.mxu0
        %v1465 = vcombine.high %v1447, %v1447
        %v1467 = vunpack.c.l.s4 1966171168
        %v1468 = vunpack.c.0.s8 %v1467
        %v1469 = vlaneseq
        %v1470 = vshrl.u32 %v1469, 7
        %v1471 = vsub.s32 %v1468, %v1470
        %v1472 = vrot.slane %v1447, %v1471
        %v1474 = vunpack.c.l.s4 1966171168
        %v1475 = vunpack.c.0.s8 %v1474
        %v1476 = vlaneseq
        %v1477 = vshrl.u32 %v1476, 7
        %v1478 = vsub.s32 %v1475, %v1477
        %v1479 = vrot.slane %v1465, %v1478
        %v1480 = vcombine.high %v1472, %v1472
        %v1481 = vcombine.high %v1479, %v1479
        %v1483 = vunpack.c.l.s4 1966171168
        %v1484 = vunpack.c.0.s8 %v1483
        %v1485 = vlaneseq
        %v1486 = vshrl.u32 %v1485, 7
        %v1487 = vsub.s32 %v1484, %v1486
        %v1488 = vrot.slane %v1472, %v1487
        %v1490 = vunpack.c.l.s4 1966171168
        %v1491 = vunpack.c.0.s8 %v1490
        %v1492 = vlaneseq
        %v1493 = vshrl.u32 %v1492, 7
        %v1494 = vsub.s32 %v1491, %v1493
        %v1495 = vrot.slane %v1479, %v1494
        %v1497 = vunpack.c.l.s4 1966171168
        %v1498 = vunpack.c.0.s8 %v1497
        %v1499 = vlaneseq
        %v1500 = vshrl.u32 %v1499, 7
        %v1501 = vsub.s32 %v1498, %v1500
        %v1502 = vrot.slane %v1480, %v1501
        %v1504 = vunpack.c.l.s4 1966171168
        %v1505 = vunpack.c.0.s8 %v1504
        %v1506 = vlaneseq
        %v1507 = vshrl.u32 %v1506, 7
        %v1508 = vsub.s32 %v1505, %v1507
        %v1509 = vrot.slane %v1481, %v1508
        %v1510 = vcombine.high %v1488, %v1488
        %v1511 = vcombine.high %v1495, %v1495
        %v1512 = vcombine.high %v1502, %v1502
        %v1513 = vcombine.high %v1509, %v1509
        %v1514 = vcombine.high %v1450, %v1450
        %v1516 = vunpack.c.l.s4 1966171168
        %v1517 = vunpack.c.0.s8 %v1516
        %v1518 = vlaneseq
        %v1519 = vshrl.u32 %v1518, 7
        %v1520 = vsub.s32 %v1517, %v1519
        %v1521 = vrot.slane %v1450, %v1520
        %v1523 = vunpack.c.l.s4 1966171168
        %v1524 = vunpack.c.0.s8 %v1523
        %v1525 = vlaneseq
        %v1526 = vshrl.u32 %v1525, 7
        %v1527 = vsub.s32 %v1524, %v1526
        %v1528 = vrot.slane %v1514, %v1527
        %v1529 = vcombine.high %v1521, %v1521
        %v1530 = vcombine.high %v1528, %v1528
        %v1532 = vunpack.c.l.s4 1966171168
        %v1533 = vunpack.c.0.s8 %v1532
        %v1534 = vlaneseq
        %v1535 = vshrl.u32 %v1534, 7
        %v1536 = vsub.s32 %v1533, %v1535
        %v1537 = vrot.slane %v1521, %v1536
        %v1539 = vunpack.c.l.s4 1966171168
        %v1540 = vunpack.c.0.s8 %v1539
        %v1541 = vlaneseq
        %v1542 = vshrl.u32 %v1541, 7
        %v1543 = vsub.s32 %v1540, %v1542
        %v1544 = vrot.slane %v1528, %v1543
        %v1546 = vunpack.c.l.s4 1966171168
        %v1547 = vunpack.c.0.s8 %v1546
        %v1548 = vlaneseq
        %v1549 = vshrl.u32 %v1548, 7
        %v1550 = vsub.s32 %v1547, %v1549
        %v1551 = vrot.slane %v1529, %v1550
        %v1553 = vunpack.c.l.s4 1966171168
        %v1554 = vunpack.c.0.s8 %v1553
        %v1555 = vlaneseq
        %v1556 = vshrl.u32 %v1555, 7
        %v1557 = vsub.s32 %v1554, %v1556
        %v1558 = vrot.slane %v1530, %v1557
        %v1559 = vcombine.high %v1537, %v1537
        %v1560 = vcombine.high %v1544, %v1544
        %v1561 = vcombine.high %v1551, %v1551
        %v1562 = vcombine.high %v1558, %v1558
        %v1563 = vcombine.high %v1455, %v1455
        %v1565 = vunpack.c.l.s4 1966171168
        %v1566 = vunpack.c.0.s8 %v1565
        %v1567 = vlaneseq
        %v1568 = vshrl.u32 %v1567, 7
        %v1569 = vsub.s32 %v1566, %v1568
        %v1570 = vrot.slane %v1455, %v1569
        %v1572 = vunpack.c.l.s4 1966171168
        %v1573 = vunpack.c.0.s8 %v1572
        %v1574 = vlaneseq
        %v1575 = vshrl.u32 %v1574, 7
        %v1576 = vsub.s32 %v1573, %v1575
        %v1577 = vrot.slane %v1563, %v1576
        %v1578 = vcombine.high %v1570, %v1570
        %v1579 = vcombine.high %v1577, %v1577
        %v1581 = vunpack.c.l.s4 1966171168
        %v1582 = vunpack.c.0.s8 %v1581
        %v1583 = vlaneseq
        %v1584 = vshrl.u32 %v1583, 7
        %v1585 = vsub.s32 %v1582, %v1584
        %v1586 = vrot.slane %v1570, %v1585
        %v1588 = vunpack.c.l.s4 1966171168
        %v1589 = vunpack.c.0.s8 %v1588
        %v1590 = vlaneseq
        %v1591 = vshrl.u32 %v1590, 7
        %v1592 = vsub.s32 %v1589, %v1591
        %v1593 = vrot.slane %v1577, %v1592
        %v1595 = vunpack.c.l.s4 1966171168
        %v1596 = vunpack.c.0.s8 %v1595
        %v1597 = vlaneseq
        %v1598 = vshrl.u32 %v1597, 7
        %v1599 = vsub.s32 %v1596, %v1598
        %v1600 = vrot.slane %v1578, %v1599
        %v1602 = vunpack.c.l.s4 1966171168
        %v1603 = vunpack.c.0.s8 %v1602
        %v1604 = vlaneseq
        %v1605 = vshrl.u32 %v1604, 7
        %v1606 = vsub.s32 %v1603, %v1605
        %v1607 = vrot.slane %v1579, %v1606
        %v1608 = vcombine.high %v1586, %v1586
        %v1609 = vcombine.high %v1593, %v1593
        %v1610 = vcombine.high %v1600, %v1600
        %v1611 = vcombine.high %v1607, %v1607
        %v1612 = vcombine.high %v1458, %v1458
        %v1614 = vunpack.c.l.s4 1966171168
        %v1615 = vunpack.c.0.s8 %v1614
        %v1616 = vlaneseq
        %v1617 = vshrl.u32 %v1616, 7
        %v1618 = vsub.s32 %v1615, %v1617
        %v1619 = vrot.slane %v1458, %v1618
        %v1621 = vunpack.c.l.s4 1966171168
        %v1622 = vunpack.c.0.s8 %v1621
        %v1623 = vlaneseq
        %v1624 = vshrl.u32 %v1623, 7
        %v1625 = vsub.s32 %v1622, %v1624
        %v1626 = vrot.slane %v1612, %v1625
        %v1627 = vcombine.high %v1619, %v1619
        %v1628 = vcombine.high %v1626, %v1626
        %v1630 = vunpack.c.l.s4 1966171168
        %v1631 = vunpack.c.0.s8 %v1630
        %v1632 = vlaneseq
        %v1633 = vshrl.u32 %v1632, 7
        %v1634 = vsub.s32 %v1631, %v1633
        %v1635 = vrot.slane %v1619, %v1634
        %v1637 = vunpack.c.l.s4 1966171168
        %v1638 = vunpack.c.0.s8 %v1637
        %v1639 = vlaneseq
        %v1640 = vshrl.u32 %v1639, 7
        %v1641 = vsub.s32 %v1638, %v1640
        %v1642 = vrot.slane %v1626, %v1641
        %v1644 = vunpack.c.l.s4 1966171168
        %v1645 = vunpack.c.0.s8 %v1644
        %v1646 = vlaneseq
        %v1647 = vshrl.u32 %v1646, 7
        %v1648 = vsub.s32 %v1645, %v1647
        %v1649 = vrot.slane %v1627, %v1648
        %v1651 = vunpack.c.l.s4 1966171168
        %v1652 = vunpack.c.0.s8 %v1651
        %v1653 = vlaneseq
        %v1654 = vshrl.u32 %v1653, 7
        %v1655 = vsub.s32 %v1652, %v1654
        %v1656 = vrot.slane %v1628, %v1655
        %v1657 = vcombine.high %v1635, %v1635
        %v1658 = vcombine.high %v1642, %v1642
        %v1659 = vcombine.high %v1649, %v1649
        %v1660 = vcombine.high %v1656, %v1656
        %v1661 = vlaneseq
        %v1662 = vshrl.u32 %v1661, 7
        %v1663 = vsub.s32 0, %v1662
        %v1664 = vrot.slane %v1488, %v1663
        %v1665 = vlaneseq
        %v1666 = vshrl.u32 %v1665, 7
        %v1667 = vsub.s32 0, %v1666
        %v1668 = vrot.slane %v1502, %v1667
        %v1669 = vlaneseq
        %v1670 = vshrl.u32 %v1669, 7
        %v1671 = vsub.s32 0, %v1670
        %v1672 = vrot.slane %v1510, %v1671
        %v1673 = vlaneseq
        %v1674 = vshrl.u32 %v1673, 7
        %v1675 = vsub.s32 0, %v1674
        %v1676 = vrot.slane %v1512, %v1675
        %v1677 = vlaneseq
        %v1678 = vshrl.u32 %v1677, 7
        %v1679 = vsub.s32 0, %v1678
        %v1680 = vrot.slane %v1495, %v1679
        %v1681 = vlaneseq
        %v1682 = vshrl.u32 %v1681, 7
        %v1683 = vsub.s32 0, %v1682
        %v1684 = vrot.slane %v1509, %v1683
        %v1685 = vlaneseq
        %v1686 = vshrl.u32 %v1685, 7
        %v1687 = vsub.s32 0, %v1686
        %v1688 = vrot.slane %v1511, %v1687
        %v1689 = vlaneseq
        %v1690 = vshrl.u32 %v1689, 7
        %v1691 = vsub.s32 0, %v1690
        %v1692 = vrot.slane %v1513, %v1691
        %v1693 = vlaneseq
        %v1694 = vshrl.u32 %v1693, 7
        %v1695 = vsub.s32 0, %v1694
        %v1696 = vrot.slane %v1537, %v1695
        %v1697 = vlaneseq
        %v1698 = vshrl.u32 %v1697, 7
        %v1699 = vsub.s32 0, %v1698
        %v1700 = vrot.slane %v1551, %v1699
        %v1701 = vlaneseq
        %v1702 = vshrl.u32 %v1701, 7
        %v1703 = vsub.s32 0, %v1702
        %v1704 = vrot.slane %v1559, %v1703
        %v1705 = vlaneseq
        %v1706 = vshrl.u32 %v1705, 7
        %v1707 = vsub.s32 0, %v1706
        %v1708 = vrot.slane %v1561, %v1707
        %v1709 = vlaneseq
        %v1710 = vshrl.u32 %v1709, 7
        %v1711 = vsub.s32 0, %v1710
        %v1712 = vrot.slane %v1544, %v1711
        %v1713 = vlaneseq
        %v1714 = vshrl.u32 %v1713, 7
        %v1715 = vsub.s32 0, %v1714
        %v1716 = vrot.slane %v1558, %v1715
        %v1717 = vlaneseq
        %v1718 = vshrl.u32 %v1717, 7
        %v1719 = vsub.s32 0, %v1718
        %v1720 = vrot.slane %v1560, %v1719
        %v1721 = vlaneseq
        %v1722 = vshrl.u32 %v1721, 7
        %v1723 = vsub.s32 0, %v1722
        %v1724 = vrot.slane %v1562, %v1723
        %v1725 = vlaneseq
        %v1726 = vshrl.u32 %v1725, 7
        %v1727 = vsub.s32 0, %v1726
        %v1728 = vrot.slane %v1586, %v1727
        %v1729 = vlaneseq
        %v1730 = vshrl.u32 %v1729, 7
        %v1731 = vsub.s32 0, %v1730
        %v1732 = vrot.slane %v1600, %v1731
        %v1733 = vlaneseq
        %v1734 = vshrl.u32 %v1733, 7
        %v1735 = vsub.s32 0, %v1734
        %v1736 = vrot.slane %v1608, %v1735
        %v1737 = vlaneseq
        %v1738 = vshrl.u32 %v1737, 7
        %v1739 = vsub.s32 0, %v1738
        %v1740 = vrot.slane %v1610, %v1739
        %v1741 = vlaneseq
        %v1742 = vshrl.u32 %v1741, 7
        %v1743 = vsub.s32 0, %v1742
        %v1744 = vrot.slane %v1593, %v1743
        %v1745 = vlaneseq
        %v1746 = vshrl.u32 %v1745, 7
        %v1747 = vsub.s32 0, %v1746
        %v1748 = vrot.slane %v1607, %v1747
        %v1749 = vlaneseq
        %v1750 = vshrl.u32 %v1749, 7
        %v1751 = vsub.s32 0, %v1750
        %v1752 = vrot.slane %v1609, %v1751
        %v1753 = vlaneseq
        %v1754 = vshrl.u32 %v1753, 7
        %v1755 = vsub.s32 0, %v1754
        %v1756 = vrot.slane %v1611, %v1755
        %v1757 = vlaneseq
        %v1758 = vshrl.u32 %v1757, 7
        %v1759 = vsub.s32 0, %v1758
        %v1760 = vrot.slane %v1635, %v1759
        %v1761 = vlaneseq
        %v1762 = vshrl.u32 %v1761, 7
        %v1763 = vsub.s32 0, %v1762
        %v1764 = vrot.slane %v1649, %v1763
        %v1765 = vlaneseq
        %v1766 = vshrl.u32 %v1765, 7
        %v1767 = vsub.s32 0, %v1766
        %v1768 = vrot.slane %v1657, %v1767
        %v1769 = vlaneseq
        %v1770 = vshrl.u32 %v1769, 7
        %v1771 = vsub.s32 0, %v1770
        %v1772 = vrot.slane %v1659, %v1771
        %v1773 = vlaneseq
        %v1774 = vshrl.u32 %v1773, 7
        %v1775 = vsub.s32 0, %v1774
        %v1776 = vrot.slane %v1642, %v1775
        %v1777 = vlaneseq
        %v1778 = vshrl.u32 %v1777, 7
        %v1779 = vsub.s32 0, %v1778
        %v1780 = vrot.slane %v1656, %v1779
        %v1781 = vlaneseq
        %v1782 = vshrl.u32 %v1781, 7
        %v1783 = vsub.s32 0, %v1782
        %v1784 = vrot.slane %v1658, %v1783
        %v1785 = vlaneseq
        %v1786 = vshrl.u32 %v1785, 7
        %v1787 = vsub.s32 0, %v1786
        %v1788 = vrot.slane %v1660, %v1787
        %v1789 = vcombine.low %v1664, %v1668
        %v1790 = vcombine.low %v1672, %v1676
        %v1792 = vunpack.c.l.s4 1983009808
        %v1793 = vunpack.c.0.s8 %v1792
        %v1794 = vlaneseq
        %v1795 = vshrl.u32 %v1794, 7
        %v1796 = vsub.s32 %v1793, %v1795
        %v1797 = vrot.slane %v1789, %v1796
        %v1799 = vunpack.c.l.s4 1983009808
        %v1800 = vunpack.c.0.s8 %v1799
        %v1801 = vlaneseq
        %v1802 = vshrl.u32 %v1801, 7
        %v1803 = vsub.s32 %v1800, %v1802
        %v1804 = vrot.slane %v1790, %v1803
        %v1805 = vcombine.low %v1797, %v1804
        %v1806 = vcombine.low %v1680, %v1684
        %v1807 = vcombine.low %v1688, %v1692
        %v1809 = vunpack.c.l.s4 1983009808
        %v1810 = vunpack.c.0.s8 %v1809
        %v1811 = vlaneseq
        %v1812 = vshrl.u32 %v1811, 7
        %v1813 = vsub.s32 %v1810, %v1812
        %v1814 = vrot.slane %v1806, %v1813
        %v1816 = vunpack.c.l.s4 1983009808
        %v1817 = vunpack.c.0.s8 %v1816
        %v1818 = vlaneseq
        %v1819 = vshrl.u32 %v1818, 7
        %v1820 = vsub.s32 %v1817, %v1819
        %v1821 = vrot.slane %v1807, %v1820
        %v1822 = vcombine.low %v1814, %v1821
        %v1823 = vcombine.low %v1696, %v1700
        %v1824 = vcombine.low %v1704, %v1708
        %v1826 = vunpack.c.l.s4 1983009808
        %v1827 = vunpack.c.0.s8 %v1826
        %v1828 = vlaneseq
        %v1829 = vshrl.u32 %v1828, 7
        %v1830 = vsub.s32 %v1827, %v1829
        %v1831 = vrot.slane %v1823, %v1830
        %v1833 = vunpack.c.l.s4 1983009808
        %v1834 = vunpack.c.0.s8 %v1833
        %v1835 = vlaneseq
        %v1836 = vshrl.u32 %v1835, 7
        %v1837 = vsub.s32 %v1834, %v1836
        %v1838 = vrot.slane %v1824, %v1837
        %v1839 = vcombine.low %v1831, %v1838
        %v1840 = vcombine.low %v1712, %v1716
        %v1841 = vcombine.low %v1720, %v1724
        %v1843 = vunpack.c.l.s4 1983009808
        %v1844 = vunpack.c.0.s8 %v1843
        %v1845 = vlaneseq
        %v1846 = vshrl.u32 %v1845, 7
        %v1847 = vsub.s32 %v1844, %v1846
        %v1848 = vrot.slane %v1840, %v1847
        %v1850 = vunpack.c.l.s4 1983009808
        %v1851 = vunpack.c.0.s8 %v1850
        %v1852 = vlaneseq
        %v1853 = vshrl.u32 %v1852, 7
        %v1854 = vsub.s32 %v1851, %v1853
        %v1855 = vrot.slane %v1841, %v1854
        %v1856 = vcombine.low %v1848, %v1855
        %v1857 = vcombine.low %v1728, %v1732
        %v1858 = vcombine.low %v1736, %v1740
        %v1860 = vunpack.c.l.s4 1983009808
        %v1861 = vunpack.c.0.s8 %v1860
        %v1862 = vlaneseq
        %v1863 = vshrl.u32 %v1862, 7
        %v1864 = vsub.s32 %v1861, %v1863
        %v1865 = vrot.slane %v1857, %v1864
        %v1867 = vunpack.c.l.s4 1983009808
        %v1868 = vunpack.c.0.s8 %v1867
        %v1869 = vlaneseq
        %v1870 = vshrl.u32 %v1869, 7
        %v1871 = vsub.s32 %v1868, %v1870
        %v1872 = vrot.slane %v1858, %v1871
        %v1873 = vcombine.low %v1865, %v1872
        %v1874 = vcombine.low %v1744, %v1748
        %v1875 = vcombine.low %v1752, %v1756
        %v1877 = vunpack.c.l.s4 1983009808
        %v1878 = vunpack.c.0.s8 %v1877
        %v1879 = vlaneseq
        %v1880 = vshrl.u32 %v1879, 7
        %v1881 = vsub.s32 %v1878, %v1880
        %v1882 = vrot.slane %v1874, %v1881
        %v1884 = vunpack.c.l.s4 1983009808
        %v1885 = vunpack.c.0.s8 %v1884
        %v1886 = vlaneseq
        %v1887 = vshrl.u32 %v1886, 7
        %v1888 = vsub.s32 %v1885, %v1887
        %v1889 = vrot.slane %v1875, %v1888
        %v1890 = vcombine.low %v1882, %v1889
        %v1891 = vcombine.low %v1760, %v1764
        %v1892 = vcombine.low %v1768, %v1772
        %v1894 = vunpack.c.l.s4 1983009808
        %v1895 = vunpack.c.0.s8 %v1894
        %v1896 = vlaneseq
        %v1897 = vshrl.u32 %v1896, 7
        %v1898 = vsub.s32 %v1895, %v1897
        %v1899 = vrot.slane %v1891, %v1898
        %v1901 = vunpack.c.l.s4 1983009808
        %v1902 = vunpack.c.0.s8 %v1901
        %v1903 = vlaneseq
        %v1904 = vshrl.u32 %v1903, 7
        %v1905 = vsub.s32 %v1902, %v1904
        %v1906 = vrot.slane %v1892, %v1905
        %v1907 = vcombine.low %v1899, %v1906
        %v1908 = vcombine.low %v1776, %v1780
        %v1909 = vcombine.low %v1784, %v1788
        %v1911 = vunpack.c.l.s4 1983009808
        %v1912 = vunpack.c.0.s8 %v1911
        %v1913 = vlaneseq
        %v1914 = vshrl.u32 %v1913, 7
        %v1915 = vsub.s32 %v1912, %v1914
        %v1916 = vrot.slane %v1908, %v1915
        %v1918 = vunpack.c.l.s4 1983009808
        %v1919 = vunpack.c.0.s8 %v1918
        %v1920 = vlaneseq
        %v1921 = vshrl.u32 %v1920, 7
        %v1922 = vsub.s32 %v1919, %v1921
        %v1923 = vrot.slane %v1909, %v1922
        %v1924 = vcombine.low %v1916, %v1923
        %v1933 = vadd.f32 %v1331, %v1805
        %v1934 = vadd.f32 %v1334, %v1822
        %v1935 = vadd.f32 %v1339, %v1805
        %v1936 = vadd.f32 %v1342, %v1822
        %v1937 = vadd.f32 %v1347, %v1839
        %v1938 = vadd.f32 %v1350, %v1856
        %v1939 = vadd.f32 %v1355, %v1839
        %v1940 = vadd.f32 %v1358, %v1856
        %v1941 = vadd.f32 %v1363, %v1873
        %v1942 = vadd.f32 %v1366, %v1890
        %v1943 = vadd.f32 %v1371, %v1873
        %v1944 = vadd.f32 %v1374, %v1890
        %v1945 = vadd.f32 %v1379, %v1907
        %v1946 = vadd.f32 %v1382, %v1924
        %v1947 = vadd.f32 %v1387, %v1907
        %v1948 = vadd.f32 %v1390, %v1924
        %v1949 = vld [vmem:[%s4] sm:$0x1]
        %v1951 = vlaneseq
        %v1952 = vshrl.u32 %v1951, 7
        %v1953 = vsub.s32 0, %v1952
        %v1954 = vrot.slane %v1949, %v1953
        %v1956 = vmul.f32 %v1933, %v1954
        %v1957 = vmul.f32 %v1934, %v1954
        %v1958 = vmul.f32 %v1935, %v1954
        %v1959 = vmul.f32 %v1936, %v1954
        %v1960 = vmul.f32 %v1937, %v1954
        %v1961 = vmul.f32 %v1938, %v1954
        %v1962 = vmul.f32 %v1939, %v1954
        %v1963 = vmul.f32 %v1940, %v1954
        %v1964 = vmul.f32 %v1941, %v1954
        %v1965 = vmul.f32 %v1942, %v1954
        %v1966 = vmul.f32 %v1943, %v1954
        %v1967 = vmul.f32 %v1944, %v1954
        %v1968 = vmul.f32 %v1945, %v1954
        %v1969 = vmul.f32 %v1946, %v1954
        %v1970 = vmul.f32 %v1947, %v1954
        %v1971 = vmul.f32 %v1948, %v1954
        %v1972 = vld [vmem:[%s5] sm:$0x1]
        %v1974 = vlaneseq
        %v1975 = vshrl.u32 %v1974, 7
        %v1976 = vsub.s32 0, %v1975
        %v1977 = vrot.slane %v1972, %v1976
        %v1979 = vadd.f32 %v1956, %v1977
        %v1980 = vadd.f32 %v1957, %v1977
        %v1981 = vadd.f32 %v1958, %v1977
        %v1982 = vadd.f32 %v1959, %v1977
        %v1983 = vadd.f32 %v1960, %v1977
        %v1984 = vadd.f32 %v1961, %v1977
        %v1985 = vadd.f32 %v1962, %v1977
        %v1986 = vadd.f32 %v1963, %v1977
        %v1987 = vadd.f32 %v1964, %v1977
        %v1988 = vadd.f32 %v1965, %v1977
        %v1989 = vadd.f32 %v1966, %v1977
        %v1990 = vadd.f32 %v1967, %v1977
        %v1991 = vadd.f32 %v1968, %v1977
        %v1992 = vadd.f32 %v1969, %v1977
        %v1993 = vadd.f32 %v1970, %v1977
        %v1994 = vadd.f32 %v1971, %v1977
        %v1995 = vmax.f32 %v1979, 0.0
        %v1996 = vmax.f32 %v1980, 0.0
        %v1997 = vmax.f32 %v1981, 0.0
        %v1998 = vmax.f32 %v1982, 0.0
        %v1999 = vmax.f32 %v1983, 0.0
        %v2000 = vmax.f32 %v1984, 0.0
        %v2001 = vmax.f32 %v1985, 0.0
        %v2002 = vmax.f32 %v1986, 0.0
        %v2003 = vmax.f32 %v1987, 0.0
        %v2004 = vmax.f32 %v1988, 0.0
        %v2005 = vmax.f32 %v1989, 0.0
        %v2006 = vmax.f32 %v1990, 0.0
        %v2007 = vmax.f32 %v1991, 0.0
        %v2008 = vmax.f32 %v1992, 0.0
        %v2009 = vmax.f32 %v1993, 0.0
        %v2010 = vmax.f32 %v1994, 0.0
        %2011 = vst [vmem:[%s273] sm:$0xff] %v1995
        %2012 = vst [vmem:[%s273 + $0x8] sm:$0xff] %v1996
        %2013 = vst [vmem:[%s273 + $0x10] sm:$0xff] %v1997
        %2014 = vst [vmem:[%s273 + $0x18] sm:$0xff] %v1998
        %2015 = vst [vmem:[%s273 + $0x20] sm:$0xff] %v1999
        %2016 = vst [vmem:[%s273 + $0x28] sm:$0xff] %v2000
        %2017 = vst [vmem:[%s273 + $0x30] sm:$0xff] %v2001
        %2018 = vst [vmem:[%s273 + $0x38] sm:$0xff] %v2002
        %2019 = vst [vmem:[%s273 + $0x40] sm:$0xff] %v2003
        %2020 = vst [vmem:[%s273 + $0x48] sm:$0xff] %v2004
        %2021 = vst [vmem:[%s273 + $0x50] sm:$0xff] %v2005
        %2022 = vst [vmem:[%s273 + $0x58] sm:$0xff] %v2006
        %2023 = vst [vmem:[%s273 + $0x60] sm:$0xff] %v2007
        %2024 = vst [vmem:[%s273 + $0x68] sm:$0xff] %v2008
        %2025 = vst [vmem:[%s273 + $0x70] sm:$0xff] %v2009
        %2026 = vst [vmem:[%s273 + $0x78] sm:$0xff] %v2010
        %s2027 = sand.u32 %s178, 1
        %s2028 = scalar_lea.sflag [#allocation3], %s2027
        %s2029 = sand.u32 %s178, 1
        %s2030 = smul.addr %s2029, 128
        %s2031 = scalar_lea.vmem [#allocation2], %s2030
        // Predicated region
        $region45: #{tpu_custom_call.1} parent=43 // pred_check
          %p2032 = pneg %p188
        $region46: #{tpu_custom_call.1} parent=43 // pred_check_branch
          %2034 = sbr.rel (%p2032) target = $region48
        $region47: #{tpu_custom_call.1} parent=43 // pred_region
          %s2035 = smul.u32 8, %s25
          %s2037 = ssub.s32 2048, 2048
          %2038 = vsyncadd %s2028, %s2037
          %s2039 = smul.addr %s2035, 2
          %s2040 = smul.addr %s24, 32
          %s2041 = sadd.s32 %s2039, %s2040
          %s2042 = smul.addr %s2041, 128
          %s2043 = scalar_lea.hbm %s6, %s2042
          %s2044 = sshll.u32 %s2031, 4
          %s2045 = int_to_ptr.vmem [resolvable:$true] %s2044
          %2050 = dma.vmem_to_hbm [thread:$0]  %s2045, 2048, %s2043, %s2028, 128, 128, 8
        $region48: #{tpu_custom_call.1} parent=43 // pred_fallthru
          _
      $region44: #{tpu_custom_call.1} parent=5 // pred_fallthru
        _
      %p2051 = scmp.le.s32.totalorder 2, %s15
      // Predicated region
      $region49: #{tpu_custom_call.1} parent=5 // pred_check
        %p2052 = pneg %p2051
      $region50: #{tpu_custom_call.1} parent=5 // pred_check_branch
        %2054 = sbr.rel (%p2052) target = $region52
      $region51: #{tpu_custom_call.1} parent=5 // pred_region
        %s2055 = ssub.s32 %s15, 2
        // Predicated region
        $region53: #{tpu_custom_call.1} parent=51 // pred_check
          %p2056 = pneg %p194
        $region54: #{tpu_custom_call.1} parent=51 // pred_check_branch
          %2058 = sbr.rel (%p2056) target = $region56
        $region55: #{tpu_custom_call.1} parent=51 // pred_region
          %s2059 = sand.u32 %s179, 1
          %s2060 = scalar_lea.sflag [#allocation3], %s2059
          %s2061 = sand.u32 %s179, 1
          %s2062 = smul.addr %s2061, 128
          %s2063 = scalar_lea.vmem [#allocation2], %s2062
          %2064 = dma.done %s2060, 2048
        $region56: #{tpu_custom_call.1} parent=51 // pred_fallthru
          _
      $region52: #{tpu_custom_call.1} parent=5 // pred_fallthru
        _
    $region6: #{tpu_custom_call.1} parent=1 // loop_footer
      %s19 = sadd.s32 1, %s15
    $region7: #{tpu_custom_call.1} parent=1 // loop_footer_branch
      %14 = sbr.rel target = $region3
    $region8: #{tpu_custom_call.1} parent=1 // loop_exit
      _
    %2065 = vsyncpa [#allocation3], 1
    %s2066 = scalar_lea.sflag [#allocation3], 1
    %2067 = vsyncpa %s2066, 1

</llo_original>
